<compile_context>
chip_gen: v7x
topology: tpu7x:2x2x1
jax: 0.10.0
libtpu: 0.0.40
codegen_flags: <defaults>
</compile_context>

<pallas_src>
import functools

import jax
import jax.numpy as jnp
import numpy as np
from jax.experimental import pallas as pl
from jax.experimental.pallas import tpu as pltpu

# ---- model config (matches a concrete PointwiseScorer instantiation) ----
DOC_FEATS = 4              # dense document features -> concat_len = 5, +1 = 6
IN_FEATS = DOC_FEATS + 2   # [document, lens, doc_score]
HIDDEN_SIZES = (32, 16)    # model_params.hidden_layer_sizes


def _linear_init(key, fan_in, fan_out):
    """PyTorch nn.Linear default init; weights stored (out, in) like PyTorch."""
    kw, kb = jax.random.split(key)
    bound = 1.0 / np.sqrt(fan_in)
    w = jax.random.uniform(kw, (fan_out, fan_in), jnp.float32, -bound, bound)
    b = jax.random.uniform(kb, (fan_out,), jnp.float32, -bound, bound)
    return w, b


def prepare_params(torch_params):
    """Repack PyTorch-layout (out,in)/(out,) params into the kernel layout.

    Done once at load time: layer-1 weight is split into its document / lens /
    doc_score columns (so the feature concat never materializes), biases become
    (out, 1) columns that broadcast over the lane (batch) axis, and the final
    (1, H2) row becomes an (H2, 1) column for the VPU reduction.
    """
    (w1, b1), (w2, b2), (w3, b3) = torch_params
    h1, h2 = w1.shape[0], w2.shape[0]
    return dict(
        w1_doc=w1[:, :DOC_FEATS],                       # (H1, DOC_FEATS)
        w1_len=w1[:, DOC_FEATS:DOC_FEATS + 1],          # (H1, 1)
        w1_score=w1[:, DOC_FEATS + 1:DOC_FEATS + 2],    # (H1, 1)
        b1=b1.reshape(h1, 1),
        w2=w2,                                          # (H2, H1)
        b2=b2.reshape(h2, 1),
        w3=w3.reshape(-1, 1),                           # (H2, 1) column
        b3=b3.reshape(1, 1),
    )


def pointwise_scorer_kernel(doc_ref, lens_ref, score_ref,
                            w1d_ref, w1l_ref, w1s_ref, b1_ref,
                            w2_ref, b2_ref, w3_ref, b3_ref, o_ref):
    """One (features, Btile) batch tile of the MLP, batch on the lane axis."""
    lens_f = lens_ref[...].astype(jnp.float32)        # (1, Bt)  int32 -> f32 (VPU)
    score = score_ref[...]                            # (1, Bt)
    doc = doc_ref[...]                                # (DOC_FEATS, Bt)

    # ---- Layer 1: Linear(6, H1) + ReLU as 6 broadcast FMAs on the VPU -------
    # (fuses the torch.cat: each input column is an outer-product FMA; a K=6
    #  MXU pass would be >95% idle, so keep the vex slot free.)
    h1 = b1_ref[...] + w1l_ref[...] * lens_f + w1s_ref[...] * score   # (H1, Bt)
    for k in range(DOC_FEATS):                        # static unroll: 4 FMAs
        h1 = h1 + w1d_ref[:, k:k + 1] * doc[k:k + 1, :]
    h1 = jnp.maximum(h1, 0.0)

    # ---- Layer 2: Linear(H1, H2) + ReLU on the MXU (lane-dense N = Btile) ---
    h2 = jnp.dot(w2_ref[...], h1, preferred_element_type=jnp.float32) + b2_ref[...]
    h2 = jnp.maximum(h2, 0.0)                         # (H2, Bt)

    # ---- Layer 3: Linear(H2, 1) + Tanh as VPU multiply + sublane reduce -----
    # (one useful MXU output column is not worth a push/pop.)
    out = jnp.sum(w3_ref[...] * h2, axis=0, keepdims=True) + b3_ref[...]  # (1, Bt)
    o_ref[...] = jnp.tanh(out)


@functools.partial(jax.jit, static_argnames=("batch_tile",))
def pointwise_scorer(document, lens, doc_score, kparams, *, batch_tile=1024):
    """document (B, DOC_FEATS) f32, lens (B,) int32, doc_score (B,) f32 -> (B,) f32."""
    b = document.shape[0]
    bt = batch_tile
    n_tiles = pl.cdiv(b, bt)
    b_pad = n_tiles * bt

    # Layout plumbing only (no compute hoisted): put batch on the lane axis and
    # pad it to a tile multiple so every block load/store is lane-dense.
    doc_t = jnp.pad(document, ((0, b_pad - b), (0, 0))).T            # (DOC_FEATS, Bp)
    lens_t = jnp.pad(lens, (0, b_pad - b)).reshape(1, b_pad)         # (1, Bp) int32
    score_t = jnp.pad(doc_score, (0, b_pad - b)).reshape(1, b_pad)   # (1, Bp)

    batch_spec = lambda rows: pl.BlockSpec((rows, bt), lambda i: (0, i))  # streamed per tile
    resident = lambda arr: pl.BlockSpec(arr.shape, lambda i: (0, 0))      # VMEM-resident weights

    w_order = ("w1_doc", "w1_len", "w1_score", "b1", "w2", "b2", "w3", "b3")
    weights = [kparams[name] for name in w_order]

    out = pl.pallas_call(
        pointwise_scorer_kernel,
        out_shape=jax.ShapeDtypeStruct((1, b_pad), jnp.float32),
        grid=(n_tiles,),
        in_specs=[batch_spec(DOC_FEATS), batch_spec(1), batch_spec(1)]
                 + [resident(w) for w in weights],
        out_specs=pl.BlockSpec((1, bt), lambda i: (0, i)),
        compiler_params=pltpu.CompilerParams(
            # batch tiles are independent -> shard across v7x's two TensorCores.
            dimension_semantics=("parallel",),
        ),
    )(doc_t, lens_t, score_t, *weights)

    return out[0, :b]   # torch.squeeze -> (B,)


def reference(document, lens, doc_score, torch_params):
    (w1, b1), (w2, b2), (w3, b3) = torch_params
    x = jnp.concatenate(
        [document, lens.astype(jnp.float32)[:, None], doc_score[:, None]], axis=1)
    x = jnp.maximum(x @ w1.T + b1, 0.0)
    x = jnp.maximum(x @ w2.T + b2, 0.0)
    x = jnp.tanh(x @ w3.T + b3)
    return jnp.squeeze(x, axis=1)


if __name__ == "__main__":
    key = jax.random.PRNGKey(0)
    k_doc, k_lens, k_score, k1, k2, k3 = jax.random.split(key, 6)

    # Not a tile multiple on purpose: exercises padding + a 2-step grid.
    B = 1200

    document = jax.random.normal(k_doc, (B, DOC_FEATS), jnp.float32)
    lens = jax.random.randint(k_lens, (B,), 1, 50, jnp.int32)
    doc_score = jax.random.normal(k_score, (B,), jnp.float32)

    # Deterministic params: Linear(6,32), Linear(32,16), Linear(16,1), PyTorch layout.
    torch_params = (
        _linear_init(k1, IN_FEATS, HIDDEN_SIZES[0]),
        _linear_init(k2, HIDDEN_SIZES[0], HIDDEN_SIZES[1]),
        _linear_init(k3, HIDDEN_SIZES[1], 1),
    )
    kparams = prepare_params(torch_params)

    out = jax.block_until_ready(pointwise_scorer(document, lens, doc_score, kparams))
    ref = jax.block_until_ready(reference(document, lens, doc_score, torch_params))

    assert out.shape == (B,)
    np.testing.assert_allclose(np.asarray(out), np.asarray(ref), rtol=1e-5, atol=1e-5)
    print("KERNEL_OK")
</pallas_src>

<mosaic_0001>
module attributes {stable_mosaic.version = 11 : i64} {
  func.func @pointwise_scorer_kernel(%arg0: i32, %arg1: memref<4x1024xf32, #tpu.memory_space<vmem>>, %arg2: memref<1x1024xi32, #tpu.memory_space<vmem>>, %arg3: memref<1x1024xf32, #tpu.memory_space<vmem>>, %arg4: memref<32x4xf32, #tpu.memory_space<vmem>>, %arg5: memref<32x1xf32, #tpu.memory_space<vmem>>, %arg6: memref<32x1xf32, #tpu.memory_space<vmem>>, %arg7: memref<32x1xf32, #tpu.memory_space<vmem>>, %arg8: memref<16x32xf32, #tpu.memory_space<vmem>>, %arg9: memref<16x1xf32, #tpu.memory_space<vmem>>, %arg10: memref<16x1xf32, #tpu.memory_space<vmem>>, %arg11: memref<1x1xf32, #tpu.memory_space<vmem>>, %arg12: memref<1x1024xf32, #tpu.memory_space<vmem>>) attributes {dimension_semantics = [#tpu.dimension_semantics<parallel>], iteration_bounds = array<i64: 2>, scalar_prefetch = 0 : i64, scratch_operands = 0 : i64, tpu.core_type = #tpu.core_type<tc>, window_params = [{transform_indices = @transform_0, window_bounds = array<i64: 4, 1024>}, {transform_indices = @transform_1, window_bounds = array<i64: 1, 1024>}, {transform_indices = @transform_2, window_bounds = array<i64: 1, 1024>}, {pipeline_mode = #tpu.pipeline_mode<synchronous>, transform_indices = @transform_3, window_bounds = array<i64: 32, 4>}, {pipeline_mode = #tpu.pipeline_mode<synchronous>, transform_indices = @transform_4, window_bounds = array<i64: 32, 1>}, {pipeline_mode = #tpu.pipeline_mode<synchronous>, transform_indices = @transform_5, window_bounds = array<i64: 32, 1>}, {pipeline_mode = #tpu.pipeline_mode<synchronous>, transform_indices = @transform_6, window_bounds = array<i64: 32, 1>}, {pipeline_mode = #tpu.pipeline_mode<synchronous>, transform_indices = @transform_7, window_bounds = array<i64: 16, 32>}, {pipeline_mode = #tpu.pipeline_mode<synchronous>, transform_indices = @transform_8, window_bounds = array<i64: 16, 1>}, {pipeline_mode = #tpu.pipeline_mode<synchronous>, transform_indices = @transform_9, window_bounds = array<i64: 16, 1>}, {pipeline_mode = #tpu.pipeline_mode<synchronous>, transform_indices = @transform_10, window_bounds = array<i64: 1, 1>}, {transform_indices = @transform_11, window_bounds = array<i64: 1, 1024>}]} {
    %c0 = arith.constant 0 : index
    %c0_0 = arith.constant 0 : index
    %0 = vector.load %arg2[%c0, %c0_0] : memref<1x1024xi32, #tpu.memory_space<vmem>>, vector<1x1024xi32>
    %1 = arith.sitofp %0 : vector<1x1024xi32> to vector<1x1024xf32>
    %c0_1 = arith.constant 0 : index
    %c0_2 = arith.constant 0 : index
    %2 = vector.load %arg3[%c0_1, %c0_2] : memref<1x1024xf32, #tpu.memory_space<vmem>>, vector<1x1024xf32>
    %c0_3 = arith.constant 0 : index
    %c0_4 = arith.constant 0 : index
    %3 = vector.load %arg1[%c0_3, %c0_4] : memref<4x1024xf32, #tpu.memory_space<vmem>>, vector<4x1024xf32>
    %c0_5 = arith.constant 0 : index
    %c0_6 = arith.constant 0 : index
    %4 = vector.load %arg7[%c0_5, %c0_6] : memref<32x1xf32, #tpu.memory_space<vmem>>, vector<32x1xf32>
    %c0_7 = arith.constant 0 : index
    %c0_8 = arith.constant 0 : index
    %5 = vector.load %arg5[%c0_7, %c0_8] : memref<32x1xf32, #tpu.memory_space<vmem>>, vector<32x1xf32>
    %6 = vector.broadcast %5 : vector<32x1xf32> to vector<32x1024xf32>
    %7 = vector.broadcast %1 : vector<1x1024xf32> to vector<32x1024xf32>
    %8 = arith.mulf %6, %7 : vector<32x1024xf32>
    %9 = vector.broadcast %4 : vector<32x1xf32> to vector<32x1024xf32>
    %10 = arith.addf %9, %8 : vector<32x1024xf32>
    %c0_9 = arith.constant 0 : index
    %c0_10 = arith.constant 0 : index
    %11 = vector.load %arg6[%c0_9, %c0_10] : memref<32x1xf32, #tpu.memory_space<vmem>>, vector<32x1xf32>
    %12 = vector.broadcast %11 : vector<32x1xf32> to vector<32x1024xf32>
    %13 = vector.broadcast %2 : vector<1x1024xf32> to vector<32x1024xf32>
    %14 = arith.mulf %12, %13 : vector<32x1024xf32>
    %15 = arith.addf %10, %14 : vector<32x1024xf32>
    %c0_11 = arith.constant 0 : index
    %c0_12 = arith.constant 0 : index
    %16 = vector.load %arg4[%c0_11, %c0_12] : memref<32x4xf32, #tpu.memory_space<vmem>>, vector<32x1xf32>
    %17 = vector.extract_strided_slice %3 {offsets = [0, 0], sizes = [1, 1024], strides = [1, 1]} : vector<4x1024xf32> to vector<1x1024xf32>
    %18 = vector.broadcast %16 : vector<32x1xf32> to vector<32x1024xf32>
    %19 = vector.broadcast %17 : vector<1x1024xf32> to vector<32x1024xf32>
    %20 = arith.mulf %18, %19 : vector<32x1024xf32>
    %21 = arith.addf %15, %20 : vector<32x1024xf32>
    %c0_13 = arith.constant 0 : index
    %c1 = arith.constant 1 : index
    %22 = vector.load %arg4[%c0_13, %c1] : memref<32x4xf32, #tpu.memory_space<vmem>>, vector<32x1xf32>
    %23 = vector.extract_strided_slice %3 {offsets = [1, 0], sizes = [1, 1024], strides = [1, 1]} : vector<4x1024xf32> to vector<1x1024xf32>
    %24 = vector.broadcast %22 : vector<32x1xf32> to vector<32x1024xf32>
    %25 = vector.broadcast %23 : vector<1x1024xf32> to vector<32x1024xf32>
    %26 = arith.mulf %24, %25 : vector<32x1024xf32>
    %27 = arith.addf %21, %26 : vector<32x1024xf32>
    %c0_14 = arith.constant 0 : index
    %c2 = arith.constant 2 : index
    %28 = vector.load %arg4[%c0_14, %c2] : memref<32x4xf32, #tpu.memory_space<vmem>>, vector<32x1xf32>
    %29 = vector.extract_strided_slice %3 {offsets = [2, 0], sizes = [1, 1024], strides = [1, 1]} : vector<4x1024xf32> to vector<1x1024xf32>
    %30 = vector.broadcast %28 : vector<32x1xf32> to vector<32x1024xf32>
    %31 = vector.broadcast %29 : vector<1x1024xf32> to vector<32x1024xf32>
    %32 = arith.mulf %30, %31 : vector<32x1024xf32>
    %33 = arith.addf %27, %32 : vector<32x1024xf32>
    %c0_15 = arith.constant 0 : index
    %c3 = arith.constant 3 : index
    %34 = vector.load %arg4[%c0_15, %c3] : memref<32x4xf32, #tpu.memory_space<vmem>>, vector<32x1xf32>
    %35 = vector.extract_strided_slice %3 {offsets = [3, 0], sizes = [1, 1024], strides = [1, 1]} : vector<4x1024xf32> to vector<1x1024xf32>
    %36 = vector.broadcast %34 : vector<32x1xf32> to vector<32x1024xf32>
    %37 = vector.broadcast %35 : vector<1x1024xf32> to vector<32x1024xf32>
    %38 = arith.mulf %36, %37 : vector<32x1024xf32>
    %39 = arith.addf %33, %38 : vector<32x1024xf32>
    %cst = arith.constant 0.000000e+00 : f32
    %40 = vector.broadcast %cst : f32 to vector<32x1024xf32>
    %41 = arith.maximumf %39, %40 : vector<32x1024xf32>
    %c0_16 = arith.constant 0 : index
    %c0_17 = arith.constant 0 : index
    %42 = vector.load %arg8[%c0_16, %c0_17] : memref<16x32xf32, #tpu.memory_space<vmem>>, vector<16x32xf32>
    %cst_18 = arith.constant dense<0.000000e+00> : vector<16x1024xf32>
    %43 = tpu.matmul %42, %41, %cst_18 {dimension_numbers = #tpu.dot_dimension_numbers<[1], [0], [0], [1], [0, 0, 1, 1], [], []>} : vector<16x32xf32>, vector<32x1024xf32>, vector<16x1024xf32> -> vector<16x1024xf32>
    %c0_19 = arith.constant 0 : index
    %c0_20 = arith.constant 0 : index
    %44 = vector.load %arg9[%c0_19, %c0_20] : memref<16x1xf32, #tpu.memory_space<vmem>>, vector<16x1xf32>
    %45 = vector.broadcast %44 : vector<16x1xf32> to vector<16x1024xf32>
    %46 = arith.addf %43, %45 : vector<16x1024xf32>
    %cst_21 = arith.constant 0.000000e+00 : f32
    %47 = vector.broadcast %cst_21 : f32 to vector<16x1024xf32>
    %48 = arith.maximumf %46, %47 : vector<16x1024xf32>
    %c0_22 = arith.constant 0 : index
    %c0_23 = arith.constant 0 : index
    %49 = vector.load %arg10[%c0_22, %c0_23] : memref<16x1xf32, #tpu.memory_space<vmem>>, vector<16x1xf32>
    %50 = vector.broadcast %49 : vector<16x1xf32> to vector<16x1024xf32>
    %51 = arith.mulf %50, %48 : vector<16x1024xf32>
    %cst_24 = arith.constant dense<0.000000e+00> : vector<1024xf32>
    %52 = vector.multi_reduction <add>, %51, %cst_24 [0] : vector<16x1024xf32> to vector<1024xf32>
    %53 = vector.shape_cast %52 : vector<1024xf32> to vector<1x1024xf32>
    %c0_25 = arith.constant 0 : index
    %c0_26 = arith.constant 0 : index
    %54 = vector.load %arg11[%c0_25, %c0_26] : memref<1x1xf32, #tpu.memory_space<vmem>>, vector<1x1xf32>
    %55 = vector.broadcast %54 : vector<1x1xf32> to vector<1x1024xf32>
    %56 = arith.addf %53, %55 : vector<1x1024xf32>
    %57 = math.tanh %56 : vector<1x1024xf32>
    %c0_27 = arith.constant 0 : index
    %c0_28 = arith.constant 0 : index
    %58 = vector.load %arg12[%c0_27, %c0_28] : memref<1x1024xf32, #tpu.memory_space<vmem>>, vector<1x1024xf32>
    tpu.vector_store %arg12[%c0_27, %c0_28], %57 {strides = array<i32>} : memref<1x1024xf32, #tpu.memory_space<vmem>>, vector<1x1024xf32>,
    return
  }
  func.func @transform_0(%arg0: i32) -> (i32, i32) {
    %c0_i32 = arith.constant 0 : i32
    %c0_i32_0 = arith.constant 0 : i32
    return %c0_i32, %arg0 : i32, i32
  }
  func.func @transform_1(%arg0: i32) -> (i32, i32) {
    %c0_i32 = arith.constant 0 : i32
    %c0_i32_0 = arith.constant 0 : i32
    return %c0_i32, %arg0 : i32, i32
  }
  func.func @transform_2(%arg0: i32) -> (i32, i32) {
    %c0_i32 = arith.constant 0 : i32
    %c0_i32_0 = arith.constant 0 : i32
    return %c0_i32, %arg0 : i32, i32
  }
  func.func @transform_3(%arg0: i32) -> (i32, i32) {
    %c0_i32 = arith.constant 0 : i32
    %c0_i32_0 = arith.constant 0 : i32
    %c0_i32_1 = arith.constant 0 : i32
    return %c0_i32, %c0_i32_0 : i32, i32
  }
  func.func @transform_4(%arg0: i32) -> (i32, i32) {
    %c0_i32 = arith.constant 0 : i32
    %c0_i32_0 = arith.constant 0 : i32
    %c0_i32_1 = arith.constant 0 : i32
    return %c0_i32, %c0_i32_0 : i32, i32
  }
  func.func @transform_5(%arg0: i32) -> (i32, i32) {
    %c0_i32 = arith.constant 0 : i32
    %c0_i32_0 = arith.constant 0 : i32
    %c0_i32_1 = arith.constant 0 : i32
    return %c0_i32, %c0_i32_0 : i32, i32
  }
  func.func @transform_6(%arg0: i32) -> (i32, i32) {
    %c0_i32 = arith.constant 0 : i32
    %c0_i32_0 = arith.constant 0 : i32
    %c0_i32_1 = arith.constant 0 : i32
    return %c0_i32, %c0_i32_0 : i32, i32
  }
  func.func @transform_7(%arg0: i32) -> (i32, i32) {
    %c0_i32 = arith.constant 0 : i32
    %c0_i32_0 = arith.constant 0 : i32
    %c0_i32_1 = arith.constant 0 : i32
    return %c0_i32, %c0_i32_0 : i32, i32
  }
  func.func @transform_8(%arg0: i32) -> (i32, i32) {
    %c0_i32 = arith.constant 0 : i32
    %c0_i32_0 = arith.constant 0 : i32
    %c0_i32_1 = arith.constant 0 : i32
    return %c0_i32, %c0_i32_0 : i32, i32
  }
  func.func @transform_9(%arg0: i32) -> (i32, i32) {
    %c0_i32 = arith.constant 0 : i32
    %c0_i32_0 = arith.constant 0 : i32
    %c0_i32_1 = arith.constant 0 : i32
    return %c0_i32, %c0_i32_0 : i32, i32
  }
  func.func @transform_10(%arg0: i32) -> (i32, i32) {
    %c0_i32 = arith.constant 0 : i32
    %c0_i32_0 = arith.constant 0 : i32
    %c0_i32_1 = arith.constant 0 : i32
    return %c0_i32, %c0_i32_0 : i32, i32
  }
  func.func @transform_11(%arg0: i32) -> (i32, i32) {
    %c0_i32 = arith.constant 0 : i32
    %c0_i32_0 = arith.constant 0 : i32
    return %c0_i32, %arg0 : i32, i32
  }
}

</mosaic_0001>

<llo_original>
// kernel: pointwise_scorer.1
$region0: #{pointwise_scorer.1}
  #allocation0 [shape = 'u32[]', space=smem, size = 0x4, offset = 0x4, fixed_abs, tag = 'smem constant byte address 0x4 - core index']
  #allocation1 [shape = 'u32[144,128]{1,0:T(1,128)}', space=vmem, size = 0x12000, scoped, tag = 'internal scratch']
  #allocation2 [shape = 'f32[1,1]{1,0:T(1,128)S(1)}', space=vmem, size = 0x200, scoped, tag = 'scoped memory for pointwise_scorer.1']
  %s0 = inlined_call_operand.vmem [shape: f32[4,2048], index: 0, kind: input, shape index: {}]
  %s1 = inlined_call_operand.vmem [shape: s32[1,2048], index: 1, kind: input, shape index: {}]
  %s2 = inlined_call_operand.vmem [shape: f32[1,2048], index: 2, kind: input, shape index: {}]
  %s3 = inlined_call_operand.vmem [shape: f32[32,4], index: 3, kind: input, shape index: {}]
  %s4 = inlined_call_operand.vmem [shape: f32[32,1], index: 4, kind: input, shape index: {}]
  %s5 = inlined_call_operand.vmem [shape: f32[32,1], index: 5, kind: input, shape index: {}]
  %s6 = inlined_call_operand.vmem [shape: f32[32,1], index: 6, kind: input, shape index: {}]
  %s7 = inlined_call_operand.vmem [shape: f32[16,32], index: 7, kind: input, shape index: {}]
  %s8 = inlined_call_operand.vmem [shape: f32[16,1], index: 8, kind: input, shape index: {}]
  %s9 = inlined_call_operand.vmem [shape: f32[16,1], index: 9, kind: input, shape index: {}]
  %s10 = inlined_call_operand.<no memory space> [shape: f32[1,1], index: 10, kind: input, shape index: {}]
  %s11 = inlined_call_operand.vmem [shape: f32[1,2048], index: 11, kind: output, shape index: {}]
  %s12 = sld [smem:[#allocation0]]
  $region77: #{pointwise_scorer.1} parent=0
    _
  %s14 = ssub.s32 1, %s12
  %s15 = scalar_select 0, %s14, %s12
  %v16 = vstv %s10
  %17 = vst [vmem:[#allocation2] sm:$0x1] %v16
  loop: start=0, step=1, limit=4
  $region2: #{pointwise_scorer.1} parent=0 // loop_pre_header
    _
  $region3: #{pointwise_scorer.1} parent=0 // loop_header
    %s19 = sphi 0, %s23
    %p20 = scmp.ge.s32.totalorder %s19, 4
    %s29 = sphi 0, %s31
    %s32 = sphi 0, %s29
    %s33 = sphi 0, %s32
    %s49 = sphi 0, %s33
    %s55 = sphi 0, %s57
    %s58 = sphi 0, %s55
    %s59 = sphi 0, %s58
    %s75 = sphi 0, %s59
    %s81 = sphi 0, %s83
    %s84 = sphi 0, %s81
    %s85 = sphi 0, %s84
    %s101 = sphi 0, %s85
    %s105 = sphi 0, %s105
    %s107 = sphi 0, %s105
    %s108 = sphi 0, %s107
    %s122 = sphi 0, %s108
    %s126 = sphi 0, %s126
    %s128 = sphi 0, %s126
    %s129 = sphi 0, %s128
    %s143 = sphi 0, %s129
    %s147 = sphi 0, %s147
    %s149 = sphi 0, %s147
    %s150 = sphi 0, %s149
    %s164 = sphi 0, %s150
    %s168 = sphi 0, %s168
    %s170 = sphi 0, %s168
    %s171 = sphi 0, %s170
    %s185 = sphi 0, %s171
    %s189 = sphi 0, %s189
    %s191 = sphi 0, %s189
    %s192 = sphi 0, %s191
    %s206 = sphi 0, %s192
    %s210 = sphi 0, %s210
    %s212 = sphi 0, %s210
    %s213 = sphi 0, %s212
    %s227 = sphi 0, %s213
    %s231 = sphi 0, %s231
    %s233 = sphi 0, %s231
    %s234 = sphi 0, %s233
    %s248 = sphi 0, %s234
    %s252 = sphi 0, %s252
    %s254 = sphi 0, %s252
    %s255 = sphi 0, %s254
    %s269 = sphi 0, %s255
    %s275 = sphi 0, %s277
    %s278 = sphi 0, %s275
    %s279 = sphi 0, %s278
    %s295 = sphi 0, %s279
  $region4: #{pointwise_scorer.1} parent=0 // loop_header_branch
    %22 = sbr.rel (%p20) target = $region8
  $region5: #{pointwise_scorer.1} parent=0 // loop_body
    %s24 = ssub.s32 %s19, 1
    %s25 = ssub.s32 %s19, 2
    %s26 = sadd.s32 %s19, 1
    %s27 = ssub.s32 %s19, %s26
    %p28 = scmp.eq.s32.totalorder %s27, 0
    %s30 = sadd.s32 %s29, 1
    %s31 = scalar_select %p28, %s29, %s30
    %p34 = pneg %p28
    %p35 = scmp.eq.s32.totalorder %s19, 1
    %p36 = por %p34, %p35
    %p37 = scmp.ne.s32.totalorder %s29, %s32
    %p38 = scmp.eq.s32.totalorder %s19, 0
    %p39 = por %p37, %p38
    %p40 = scmp.ne.s32.totalorder %s29, %s32
    %p41 = scmp.eq.s32.totalorder %s24, 1
    %p42 = por %p40, %p41
    %p43 = scmp.ne.s32.totalorder %s32, %s33
    %p44 = scmp.eq.s32.totalorder %s24, 0
    %p45 = por %p43, %p44
    %p46 = scmp.ne.s32.totalorder %s32, %s33
    %p47 = scmp.eq.s32.totalorder %s25, 1
    %p48 = por %p46, %p47
    %p50 = scmp.ne.s32.totalorder %s33, %s49
    %p51 = scmp.eq.s32.totalorder %s25, 0
    %p52 = por %p50, %p51
    %s53 = ssub.s32 %s19, %s26
    %p54 = scmp.eq.s32.totalorder %s53, 0
    %s56 = sadd.s32 %s55, 1
    %s57 = scalar_select %p54, %s55, %s56
    %p60 = pneg %p54
    %p61 = scmp.eq.s32.totalorder %s19, 1
    %p62 = por %p60, %p61
    %p63 = scmp.ne.s32.totalorder %s55, %s58
    %p64 = scmp.eq.s32.totalorder %s19, 0
    %p65 = por %p63, %p64
    %p66 = scmp.ne.s32.totalorder %s55, %s58
    %p67 = scmp.eq.s32.totalorder %s24, 1
    %p68 = por %p66, %p67
    %p69 = scmp.ne.s32.totalorder %s58, %s59
    %p70 = scmp.eq.s32.totalorder %s24, 0
    %p71 = por %p69, %p70
    %p72 = scmp.ne.s32.totalorder %s58, %s59
    %p73 = scmp.eq.s32.totalorder %s25, 1
    %p74 = por %p72, %p73
    %p76 = scmp.ne.s32.totalorder %s59, %s75
    %p77 = scmp.eq.s32.totalorder %s25, 0
    %p78 = por %p76, %p77
    %s79 = ssub.s32 %s19, %s26
    %p80 = scmp.eq.s32.totalorder %s79, 0
    %s82 = sadd.s32 %s81, 1
    %s83 = scalar_select %p80, %s81, %s82
    %p86 = pneg %p80
    %p87 = scmp.eq.s32.totalorder %s19, 1
    %p88 = por %p86, %p87
    %p89 = scmp.ne.s32.totalorder %s81, %s84
    %p90 = scmp.eq.s32.totalorder %s19, 0
    %p91 = por %p89, %p90
    %p92 = scmp.ne.s32.totalorder %s81, %s84
    %p93 = scmp.eq.s32.totalorder %s24, 1
    %p94 = por %p92, %p93
    %p95 = scmp.ne.s32.totalorder %s84, %s85
    %p96 = scmp.eq.s32.totalorder %s24, 0
    %p97 = por %p95, %p96
    %p98 = scmp.ne.s32.totalorder %s84, %s85
    %p99 = scmp.eq.s32.totalorder %s25, 1
    %p100 = por %p98, %p99
    %p102 = scmp.ne.s32.totalorder %s85, %s101
    %p103 = scmp.eq.s32.totalorder %s25, 0
    %p104 = por %p102, %p103
    %s106 = sadd.s32 %s105, 1
    %p109 = scmp.eq.s32.totalorder %s19, 1
    %p110 = scmp.ne.s32.totalorder %s105, %s107
    %p111 = scmp.eq.s32.totalorder %s19, 0
    %p112 = por %p110, %p111
    %p113 = scmp.ne.s32.totalorder %s105, %s107
    %p114 = scmp.eq.s32.totalorder %s24, 1
    %p115 = por %p113, %p114
    %p116 = scmp.ne.s32.totalorder %s107, %s108
    %p117 = scmp.eq.s32.totalorder %s24, 0
    %p118 = por %p116, %p117
    %p119 = scmp.ne.s32.totalorder %s107, %s108
    %p120 = scmp.eq.s32.totalorder %s25, 1
    %p121 = por %p119, %p120
    %p123 = scmp.ne.s32.totalorder %s108, %s122
    %p124 = scmp.eq.s32.totalorder %s25, 0
    %p125 = por %p123, %p124
    %s127 = sadd.s32 %s126, 1
    %p130 = scmp.eq.s32.totalorder %s19, 1
    %p131 = scmp.ne.s32.totalorder %s126, %s128
    %p132 = scmp.eq.s32.totalorder %s19, 0
    %p133 = por %p131, %p132
    %p134 = scmp.ne.s32.totalorder %s126, %s128
    %p135 = scmp.eq.s32.totalorder %s24, 1
    %p136 = por %p134, %p135
    %p137 = scmp.ne.s32.totalorder %s128, %s129
    %p138 = scmp.eq.s32.totalorder %s24, 0
    %p139 = por %p137, %p138
    %p140 = scmp.ne.s32.totalorder %s128, %s129
    %p141 = scmp.eq.s32.totalorder %s25, 1
    %p142 = por %p140, %p141
    %p144 = scmp.ne.s32.totalorder %s129, %s143
    %p145 = scmp.eq.s32.totalorder %s25, 0
    %p146 = por %p144, %p145
    %s148 = sadd.s32 %s147, 1
    %p151 = scmp.eq.s32.totalorder %s19, 1
    %p152 = scmp.ne.s32.totalorder %s147, %s149
    %p153 = scmp.eq.s32.totalorder %s19, 0
    %p154 = por %p152, %p153
    %p155 = scmp.ne.s32.totalorder %s147, %s149
    %p156 = scmp.eq.s32.totalorder %s24, 1
    %p157 = por %p155, %p156
    %p158 = scmp.ne.s32.totalorder %s149, %s150
    %p159 = scmp.eq.s32.totalorder %s24, 0
    %p160 = por %p158, %p159
    %p161 = scmp.ne.s32.totalorder %s149, %s150
    %p162 = scmp.eq.s32.totalorder %s25, 1
    %p163 = por %p161, %p162
    %p165 = scmp.ne.s32.totalorder %s150, %s164
    %p166 = scmp.eq.s32.totalorder %s25, 0
    %p167 = por %p165, %p166
    %s169 = sadd.s32 %s168, 1
    %p172 = scmp.eq.s32.totalorder %s19, 1
    %p173 = scmp.ne.s32.totalorder %s168, %s170
    %p174 = scmp.eq.s32.totalorder %s19, 0
    %p175 = por %p173, %p174
    %p176 = scmp.ne.s32.totalorder %s168, %s170
    %p177 = scmp.eq.s32.totalorder %s24, 1
    %p178 = por %p176, %p177
    %p179 = scmp.ne.s32.totalorder %s170, %s171
    %p180 = scmp.eq.s32.totalorder %s24, 0
    %p181 = por %p179, %p180
    %p182 = scmp.ne.s32.totalorder %s170, %s171
    %p183 = scmp.eq.s32.totalorder %s25, 1
    %p184 = por %p182, %p183
    %p186 = scmp.ne.s32.totalorder %s171, %s185
    %p187 = scmp.eq.s32.totalorder %s25, 0
    %p188 = por %p186, %p187
    %s190 = sadd.s32 %s189, 1
    %p193 = scmp.eq.s32.totalorder %s19, 1
    %p194 = scmp.ne.s32.totalorder %s189, %s191
    %p195 = scmp.eq.s32.totalorder %s19, 0
    %p196 = por %p194, %p195
    %p197 = scmp.ne.s32.totalorder %s189, %s191
    %p198 = scmp.eq.s32.totalorder %s24, 1
    %p199 = por %p197, %p198
    %p200 = scmp.ne.s32.totalorder %s191, %s192
    %p201 = scmp.eq.s32.totalorder %s24, 0
    %p202 = por %p200, %p201
    %p203 = scmp.ne.s32.totalorder %s191, %s192
    %p204 = scmp.eq.s32.totalorder %s25, 1
    %p205 = por %p203, %p204
    %p207 = scmp.ne.s32.totalorder %s192, %s206
    %p208 = scmp.eq.s32.totalorder %s25, 0
    %p209 = por %p207, %p208
    %s211 = sadd.s32 %s210, 1
    %p214 = scmp.eq.s32.totalorder %s19, 1
    %p215 = scmp.ne.s32.totalorder %s210, %s212
    %p216 = scmp.eq.s32.totalorder %s19, 0
    %p217 = por %p215, %p216
    %p218 = scmp.ne.s32.totalorder %s210, %s212
    %p219 = scmp.eq.s32.totalorder %s24, 1
    %p220 = por %p218, %p219
    %p221 = scmp.ne.s32.totalorder %s212, %s213
    %p222 = scmp.eq.s32.totalorder %s24, 0
    %p223 = por %p221, %p222
    %p224 = scmp.ne.s32.totalorder %s212, %s213
    %p225 = scmp.eq.s32.totalorder %s25, 1
    %p226 = por %p224, %p225
    %p228 = scmp.ne.s32.totalorder %s213, %s227
    %p229 = scmp.eq.s32.totalorder %s25, 0
    %p230 = por %p228, %p229
    %s232 = sadd.s32 %s231, 1
    %p235 = scmp.eq.s32.totalorder %s19, 1
    %p236 = scmp.ne.s32.totalorder %s231, %s233
    %p237 = scmp.eq.s32.totalorder %s19, 0
    %p238 = por %p236, %p237
    %p239 = scmp.ne.s32.totalorder %s231, %s233
    %p240 = scmp.eq.s32.totalorder %s24, 1
    %p241 = por %p239, %p240
    %p242 = scmp.ne.s32.totalorder %s233, %s234
    %p243 = scmp.eq.s32.totalorder %s24, 0
    %p244 = por %p242, %p243
    %p245 = scmp.ne.s32.totalorder %s233, %s234
    %p246 = scmp.eq.s32.totalorder %s25, 1
    %p247 = por %p245, %p246
    %p249 = scmp.ne.s32.totalorder %s234, %s248
    %p250 = scmp.eq.s32.totalorder %s25, 0
    %p251 = por %p249, %p250
    %s253 = sadd.s32 %s252, 1
    %p256 = scmp.eq.s32.totalorder %s19, 1
    %p257 = scmp.ne.s32.totalorder %s252, %s254
    %p258 = scmp.eq.s32.totalorder %s19, 0
    %p259 = por %p257, %p258
    %p260 = scmp.ne.s32.totalorder %s252, %s254
    %p261 = scmp.eq.s32.totalorder %s24, 1
    %p262 = por %p260, %p261
    %p263 = scmp.ne.s32.totalorder %s254, %s255
    %p264 = scmp.eq.s32.totalorder %s24, 0
    %p265 = por %p263, %p264
    %p266 = scmp.ne.s32.totalorder %s254, %s255
    %p267 = scmp.eq.s32.totalorder %s25, 1
    %p268 = por %p266, %p267
    %p270 = scmp.ne.s32.totalorder %s255, %s269
    %p271 = scmp.eq.s32.totalorder %s25, 0
    %p272 = por %p270, %p271
    %s273 = ssub.s32 %s19, %s26
    %p274 = scmp.eq.s32.totalorder %s273, 0
    %s276 = sadd.s32 %s275, 1
    %s277 = scalar_select %p274, %s275, %s276
    %p280 = pneg %p274
    %p281 = scmp.eq.s32.totalorder %s19, 1
    %p282 = por %p280, %p281
    %p283 = scmp.ne.s32.totalorder %s275, %s278
    %p284 = scmp.eq.s32.totalorder %s19, 0
    %p285 = por %p283, %p284
    %p286 = scmp.ne.s32.totalorder %s275, %s278
    %p287 = scmp.eq.s32.totalorder %s24, 1
    %p288 = por %p286, %p287
    %p289 = scmp.ne.s32.totalorder %s278, %s279
    %p290 = scmp.eq.s32.totalorder %s24, 0
    %p291 = por %p289, %p290
    %p292 = scmp.ne.s32.totalorder %s278, %s279
    %p293 = scmp.eq.s32.totalorder %s25, 1
    %p294 = por %p292, %p293
    %p296 = scmp.ne.s32.totalorder %s279, %s295
    %p297 = scmp.eq.s32.totalorder %s25, 0
    %p298 = por %p296, %p297
    %p299 = scmp.le.s32.totalorder 1, %s19
    %p300 = scmp.lt.s32.totalorder %s19, 3
    %p301 = pnand %p299, %p300
    %p302 = pneg %p301
    // Predicated region
    $region9: #{pointwise_scorer.1} parent=5 // pred_check
      _
    $region10: #{pointwise_scorer.1} parent=5 // pred_check_branch
      %304 = sbr.rel (%p301) target = $region12
    $region11: #{pointwise_scorer.1} parent=5 // pred_region
      %s305 = ssub.s32 %s19, 1
      // Predicated region
      $region13: #{pointwise_scorer.1} parent=11 // pred_check
        %p306 = pneg %p118
      $region14: #{pointwise_scorer.1} parent=11 // pred_check_branch
        %308 = sbr.rel (%p306) target = $region16
      $region15: #{pointwise_scorer.1} parent=11 // pred_region
        _
      $region16: #{pointwise_scorer.1} parent=11 // pred_fallthru
        _
      // Predicated region
      $region17: #{pointwise_scorer.1} parent=11 // pred_check
        %p309 = pneg %p139
      $region18: #{pointwise_scorer.1} parent=11 // pred_check_branch
        %311 = sbr.rel (%p309) target = $region20
      $region19: #{pointwise_scorer.1} parent=11 // pred_region
        _
      $region20: #{pointwise_scorer.1} parent=11 // pred_fallthru
        _
      // Predicated region
      $region21: #{pointwise_scorer.1} parent=11 // pred_check
        %p312 = pneg %p160
      $region22: #{pointwise_scorer.1} parent=11 // pred_check_branch
        %314 = sbr.rel (%p312) target = $region24
      $region23: #{pointwise_scorer.1} parent=11 // pred_region
        _
      $region24: #{pointwise_scorer.1} parent=11 // pred_fallthru
        _
      // Predicated region
      $region25: #{pointwise_scorer.1} parent=11 // pred_check
        %p315 = pneg %p181
      $region26: #{pointwise_scorer.1} parent=11 // pred_check_branch
        %317 = sbr.rel (%p315) target = $region28
      $region27: #{pointwise_scorer.1} parent=11 // pred_region
        _
      $region28: #{pointwise_scorer.1} parent=11 // pred_fallthru
        _
      // Predicated region
      $region29: #{pointwise_scorer.1} parent=11 // pred_check
        %p318 = pneg %p202
      $region30: #{pointwise_scorer.1} parent=11 // pred_check_branch
        %320 = sbr.rel (%p318) target = $region32
      $region31: #{pointwise_scorer.1} parent=11 // pred_region
        _
      $region32: #{pointwise_scorer.1} parent=11 // pred_fallthru
        _
      // Predicated region
      $region33: #{pointwise_scorer.1} parent=11 // pred_check
        %p321 = pneg %p223
      $region34: #{pointwise_scorer.1} parent=11 // pred_check_branch
        %323 = sbr.rel (%p321) target = $region36
      $region35: #{pointwise_scorer.1} parent=11 // pred_region
        _
      $region36: #{pointwise_scorer.1} parent=11 // pred_fallthru
        _
      // Predicated region
      $region37: #{pointwise_scorer.1} parent=11 // pred_check
        %p324 = pneg %p244
      $region38: #{pointwise_scorer.1} parent=11 // pred_check_branch
        %326 = sbr.rel (%p324) target = $region40
      $region39: #{pointwise_scorer.1} parent=11 // pred_region
        _
      $region40: #{pointwise_scorer.1} parent=11 // pred_fallthru
        _
      // Predicated region
      $region41: #{pointwise_scorer.1} parent=11 // pred_check
        %p327 = pneg %p265
      $region42: #{pointwise_scorer.1} parent=11 // pred_check_branch
        %329 = sbr.rel (%p327) target = $region44
      $region43: #{pointwise_scorer.1} parent=11 // pred_region
        _
      $region44: #{pointwise_scorer.1} parent=11 // pred_fallthru
        _
    $region12: #{pointwise_scorer.1} parent=5 // pred_fallthru
      _
    %p330 = scmp.lt.s32.totalorder %s19, 2
    // Predicated region
    $region45: #{pointwise_scorer.1} parent=5 // pred_check
      %p331 = pneg %p330
    $region46: #{pointwise_scorer.1} parent=5 // pred_check_branch
      %333 = sbr.rel (%p331) target = $region48
    $region47: #{pointwise_scorer.1} parent=5 // pred_region
      // Predicated region
      $region49: #{pointwise_scorer.1} parent=47 // pred_check
        %p334 = pneg %p39
      $region50: #{pointwise_scorer.1} parent=47 // pred_check_branch
        %336 = sbr.rel (%p334) target = $region52
      $region51: #{pointwise_scorer.1} parent=47 // pred_region
        %s337 = smul.u32 8, %s19
        %p338 = scmp.lt.s32.totalorder %s337, 15
        %s339 = scalar_select %p338, %s337, 15
        %s340 = smul.addr %s339, 4
        %s341 = scalar_lea.vmem %s0, %s340
        %s342 = smul.u32 8, %s19
      $region52: #{pointwise_scorer.1} parent=47 // pred_fallthru
        _
      // Predicated region
      $region53: #{pointwise_scorer.1} parent=47 // pred_check
        %p343 = pneg %p65
      $region54: #{pointwise_scorer.1} parent=47 // pred_check_branch
        %345 = sbr.rel (%p343) target = $region56
      $region55: #{pointwise_scorer.1} parent=47 // pred_region
        %s346 = smul.u32 8, %s19
        %p347 = scmp.lt.s32.totalorder %s346, 15
        %s348 = scalar_select %p347, %s346, 15
        %s349 = scalar_lea.vmem %s1, %s348
        %s350 = smul.u32 8, %s19
      $region56: #{pointwise_scorer.1} parent=47 // pred_fallthru
        _
      // Predicated region
      $region57: #{pointwise_scorer.1} parent=47 // pred_check
        %p351 = pneg %p91
      $region58: #{pointwise_scorer.1} parent=47 // pred_check_branch
        %353 = sbr.rel (%p351) target = $region60
      $region59: #{pointwise_scorer.1} parent=47 // pred_region
        %s354 = smul.u32 8, %s19
        %p355 = scmp.lt.s32.totalorder %s354, 15
        %s356 = scalar_select %p355, %s354, 15
        %s357 = scalar_lea.vmem %s2, %s356
        %s358 = smul.u32 8, %s19
      $region60: #{pointwise_scorer.1} parent=47 // pred_fallthru
        _
    $region48: #{pointwise_scorer.1} parent=5 // pred_fallthru
      _
    %p359 = scmp.le.s32.totalorder 1, %s19
    %p360 = scmp.lt.s32.totalorder %s19, 3
    %p361 = pnand %p359, %p360
    %p362 = pneg %p361
    // Predicated region
    $region61: #{pointwise_scorer.1} parent=5 // pred_check
      _
    $region62: #{pointwise_scorer.1} parent=5 // pred_check_branch
      %364 = sbr.rel (%p361) target = $region64
    $region63: #{pointwise_scorer.1} parent=5 // pred_region
      %s365 = ssub.s32 %s19, 1
      %s366 = smul.u32 8, %s24
      %p367 = scmp.lt.s32.totalorder %s366, 15
      %s368 = scalar_select %p367, %s366, 15
      %s369 = smul.addr %s368, 4
      %s370 = scalar_lea.vmem %s0, %s369
      %p371 = pneg %p45
      %p372 = pneg %p42
      %s373 = smul.u32 8, %s24
      %p374 = scmp.lt.s32.totalorder %s373, 15
      %s375 = scalar_select %p374, %s373, 15
      %s376 = scalar_lea.vmem %s1, %s375
      %p377 = pneg %p71
      %p378 = pneg %p68
      %s379 = smul.u32 8, %s24
      %p380 = scmp.lt.s32.totalorder %s379, 15
      %s381 = scalar_select %p380, %s379, 15
      %s382 = scalar_lea.vmem %s2, %s381
      %p383 = pneg %p97
      %p384 = pneg %p94
      %p385 = pneg %p118
      %p386 = pneg %p115
      %p387 = pneg %p139
      %p388 = pneg %p136
      %p389 = pneg %p160
      %p390 = pneg %p157
      %p391 = pneg %p181
      %p392 = pneg %p178
      %p393 = pneg %p202
      %p394 = pneg %p199
      %p395 = pneg %p223
      %p396 = pneg %p220
      %p397 = pneg %p244
      %p398 = pneg %p241
      %p399 = pneg %p265
      %p400 = pneg %p262
      %p401 = pneg %p291
      %p402 = pneg %p288
      %s403 = smul.u32 8, %s24
      %p404 = scmp.lt.s32.totalorder %s403, 15
      %s405 = scalar_select %p404, %s403, 15
      %s406 = scalar_lea.vmem %s11, %s405
      %s407 = smul.u32 8, %s24
      %p408 = scmp.lt.s32.totalorder %s407, 15
      %s409 = scalar_select %p408, %s407, 15
      %s410 = smul.addr %s409, 4
      %s411 = scalar_lea.vmem %s0, %s410
      %s412 = smul.u32 8, %s24
      %s413 = smul.u32 8, %s24
      %p414 = scmp.lt.s32.totalorder %s413, 15
      %s415 = scalar_select %p414, %s413, 15
      %s416 = scalar_lea.vmem %s1, %s415
      %s417 = smul.u32 8, %s24
      %s418 = smul.u32 8, %s24
      %p419 = scmp.lt.s32.totalorder %s418, 15
      %s420 = scalar_select %p419, %s418, 15
      %s421 = scalar_lea.vmem %s2, %s420
      %s422 = smul.u32 8, %s24
      %s423 = smul.u32 8, %s24
      %p424 = scmp.lt.s32.totalorder %s423, 15
      %s425 = scalar_select %p424, %s423, 15
      %s426 = scalar_lea.vmem %s11, %s425
      %s427 = smul.u32 8, %s24
      %v428 = vld [vmem:[%s416] sm:$0xff]
      %v429 = vcvt.s32.f32 %v428
      %v430 = vld [vmem:[%s421] sm:$0xff]
      %v431 = vld [vmem:[%s411] sm:$0xff]
      %v432 = vld [vmem:[%s411 + $0x8] sm:$0xff]
      %v433 = vld [vmem:[%s411 + $0x10] sm:$0xff]
      %v434 = vld [vmem:[%s411 + $0x18] sm:$0xff]
      %v435 = vld [vmem:[%s6] sm:$0xff]
      %v436 = vld [vmem:[%s6 + $0x8] sm:$0xff]
      %v437 = vld [vmem:[%s6 + $0x10] sm:$0xff]
      %v438 = vld [vmem:[%s6 + $0x18] sm:$0xff]
      %v439 = vld [vmem:[%s4] sm:$0xff]
      %v440 = vld [vmem:[%s4 + $0x8] sm:$0xff]
      %v441 = vld [vmem:[%s4 + $0x10] sm:$0xff]
      %v442 = vld [vmem:[%s4 + $0x18] sm:$0xff]
      %444 = vset.pattern.permute.xlu0 0
      %445 = vperm.xlu0 %444, %v439
      %v446 = vpop.permute.xlu0 %445
      %449 = vset.pattern.permute.xlu0 0
      %450 = vperm.xlu0 %449, %v440
      %v451 = vpop.permute.xlu0 %450
      %454 = vset.pattern.permute.xlu0 0
      %455 = vperm.xlu0 %454, %v441
      %v456 = vpop.permute.xlu0 %455
      %459 = vset.pattern.permute.xlu0 0
      %460 = vperm.xlu0 %459, %v442
      %v461 = vpop.permute.xlu0 %460
      %v464 = vlaneseq
      %v465 = vshrl.u32 %v464, 7
      %v466 = vsub.s32 0, %v465
      %v467 = vrot.slane %v429, %v466
      %v468 = vlaneseq
      %v469 = vshrl.u32 %v468, 7
      %v470 = vsub.s32 1, %v469
      %v471 = vrot.slane %v429, %v470
      %v472 = vlaneseq
      %v473 = vshrl.u32 %v472, 7
      %v474 = vsub.s32 2, %v473
      %v475 = vrot.slane %v429, %v474
      %v476 = vlaneseq
      %v477 = vshrl.u32 %v476, 7
      %v478 = vsub.s32 3, %v477
      %v479 = vrot.slane %v429, %v478
      %v480 = vlaneseq
      %v481 = vshrl.u32 %v480, 7
      %v482 = vsub.s32 4, %v481
      %v483 = vrot.slane %v429, %v482
      %v484 = vlaneseq
      %v485 = vshrl.u32 %v484, 7
      %v486 = vsub.s32 5, %v485
      %v487 = vrot.slane %v429, %v486
      %v488 = vlaneseq
      %v489 = vshrl.u32 %v488, 7
      %v490 = vsub.s32 6, %v489
      %v491 = vrot.slane %v429, %v490
      %v492 = vlaneseq
      %v493 = vshrl.u32 %v492, 7
      %v494 = vsub.s32 7, %v493
      %v495 = vrot.slane %v429, %v494
      %v504 = vmul.f32 %v446, %v467
      %v505 = vmul.f32 %v446, %v471
      %v506 = vmul.f32 %v446, %v475
      %v507 = vmul.f32 %v446, %v479
      %v508 = vmul.f32 %v446, %v483
      %v509 = vmul.f32 %v446, %v487
      %v510 = vmul.f32 %v446, %v491
      %v511 = vmul.f32 %v446, %v495
      %v512 = vmul.f32 %v451, %v467
      %v513 = vmul.f32 %v451, %v471
      %v514 = vmul.f32 %v451, %v475
      %v515 = vmul.f32 %v451, %v479
      %v516 = vmul.f32 %v451, %v483
      %v517 = vmul.f32 %v451, %v487
      %v518 = vmul.f32 %v451, %v491
      %v519 = vmul.f32 %v451, %v495
      %v520 = vmul.f32 %v456, %v467
      %v521 = vmul.f32 %v456, %v471
      %v522 = vmul.f32 %v456, %v475
      %v523 = vmul.f32 %v456, %v479
      %v524 = vmul.f32 %v456, %v483
      %v525 = vmul.f32 %v456, %v487
      %v526 = vmul.f32 %v456, %v491
      %v527 = vmul.f32 %v456, %v495
      %v528 = vmul.f32 %v461, %v467
      %v529 = vmul.f32 %v461, %v471
      %v530 = vmul.f32 %v461, %v475
      %v531 = vmul.f32 %v461, %v479
      %v532 = vmul.f32 %v461, %v483
      %v533 = vmul.f32 %v461, %v487
      %v534 = vmul.f32 %v461, %v491
      %v535 = vmul.f32 %v461, %v495
      %537 = vset.pattern.permute.xlu0 0
      %538 = vperm.xlu0 %537, %v435
      %v539 = vpop.permute.xlu0 %538
      %542 = vset.pattern.permute.xlu0 0
      %543 = vperm.xlu0 %542, %v436
      %v544 = vpop.permute.xlu0 %543
      %547 = vset.pattern.permute.xlu0 0
      %548 = vperm.xlu0 %547, %v437
      %v549 = vpop.permute.xlu0 %548
      %552 = vset.pattern.permute.xlu0 0
      %553 = vperm.xlu0 %552, %v438
      %v554 = vpop.permute.xlu0 %553
      %v556 = vadd.f32 %v539, %v504
      %v557 = vadd.f32 %v539, %v505
      %v558 = vadd.f32 %v539, %v506
      %v559 = vadd.f32 %v539, %v507
      %v560 = vadd.f32 %v539, %v508
      %v561 = vadd.f32 %v539, %v509
      %v562 = vadd.f32 %v539, %v510
      %v563 = vadd.f32 %v539, %v511
      %v564 = vadd.f32 %v544, %v512
      %v565 = vadd.f32 %v544, %v513
      %v566 = vadd.f32 %v544, %v514
      %v567 = vadd.f32 %v544, %v515
      %v568 = vadd.f32 %v544, %v516
      %v569 = vadd.f32 %v544, %v517
      %v570 = vadd.f32 %v544, %v518
      %v571 = vadd.f32 %v544, %v519
      %v572 = vadd.f32 %v549, %v520
      %v573 = vadd.f32 %v549, %v521
      %v574 = vadd.f32 %v549, %v522
      %v575 = vadd.f32 %v549, %v523
      %v576 = vadd.f32 %v549, %v524
      %v577 = vadd.f32 %v549, %v525
      %v578 = vadd.f32 %v549, %v526
      %v579 = vadd.f32 %v549, %v527
      %v580 = vadd.f32 %v554, %v528
      %v581 = vadd.f32 %v554, %v529
      %v582 = vadd.f32 %v554, %v530
      %v583 = vadd.f32 %v554, %v531
      %v584 = vadd.f32 %v554, %v532
      %v585 = vadd.f32 %v554, %v533
      %v586 = vadd.f32 %v554, %v534
      %v587 = vadd.f32 %v554, %v535
      %v588 = vld [vmem:[%s5] sm:$0xff]
      %v589 = vld [vmem:[%s5 + $0x8] sm:$0xff]
      %v590 = vld [vmem:[%s5 + $0x10] sm:$0xff]
      %v591 = vld [vmem:[%s5 + $0x18] sm:$0xff]
      %593 = vset.pattern.permute.xlu0 0
      %594 = vperm.xlu0 %593, %v588
      %v595 = vpop.permute.xlu0 %594
      %598 = vset.pattern.permute.xlu0 0
      %599 = vperm.xlu0 %598, %v589
      %v600 = vpop.permute.xlu0 %599
      %603 = vset.pattern.permute.xlu0 0
      %604 = vperm.xlu0 %603, %v590
      %v605 = vpop.permute.xlu0 %604
      %608 = vset.pattern.permute.xlu0 0
      %609 = vperm.xlu0 %608, %v591
      %v610 = vpop.permute.xlu0 %609
      %v613 = vlaneseq
      %v614 = vshrl.u32 %v613, 7
      %v615 = vsub.s32 0, %v614
      %v616 = vrot.slane %v430, %v615
      %v617 = vlaneseq
      %v618 = vshrl.u32 %v617, 7
      %v619 = vsub.s32 1, %v618
      %v620 = vrot.slane %v430, %v619
      %v621 = vlaneseq
      %v622 = vshrl.u32 %v621, 7
      %v623 = vsub.s32 2, %v622
      %v624 = vrot.slane %v430, %v623
      %v625 = vlaneseq
      %v626 = vshrl.u32 %v625, 7
      %v627 = vsub.s32 3, %v626
      %v628 = vrot.slane %v430, %v627
      %v629 = vlaneseq
      %v630 = vshrl.u32 %v629, 7
      %v631 = vsub.s32 4, %v630
      %v632 = vrot.slane %v430, %v631
      %v633 = vlaneseq
      %v634 = vshrl.u32 %v633, 7
      %v635 = vsub.s32 5, %v634
      %v636 = vrot.slane %v430, %v635
      %v637 = vlaneseq
      %v638 = vshrl.u32 %v637, 7
      %v639 = vsub.s32 6, %v638
      %v640 = vrot.slane %v430, %v639
      %v641 = vlaneseq
      %v642 = vshrl.u32 %v641, 7
      %v643 = vsub.s32 7, %v642
      %v644 = vrot.slane %v430, %v643
      %v653 = vmul.f32 %v595, %v616
      %v654 = vmul.f32 %v595, %v620
      %v655 = vmul.f32 %v595, %v624
      %v656 = vmul.f32 %v595, %v628
      %v657 = vmul.f32 %v595, %v632
      %v658 = vmul.f32 %v595, %v636
      %v659 = vmul.f32 %v595, %v640
      %v660 = vmul.f32 %v595, %v644
      %v661 = vmul.f32 %v600, %v616
      %v662 = vmul.f32 %v600, %v620
      %v663 = vmul.f32 %v600, %v624
      %v664 = vmul.f32 %v600, %v628
      %v665 = vmul.f32 %v600, %v632
      %v666 = vmul.f32 %v600, %v636
      %v667 = vmul.f32 %v600, %v640
      %v668 = vmul.f32 %v600, %v644
      %v669 = vmul.f32 %v605, %v616
      %v670 = vmul.f32 %v605, %v620
      %v671 = vmul.f32 %v605, %v624
      %v672 = vmul.f32 %v605, %v628
      %v673 = vmul.f32 %v605, %v632
      %v674 = vmul.f32 %v605, %v636
      %v675 = vmul.f32 %v605, %v640
      %v676 = vmul.f32 %v605, %v644
      %v677 = vmul.f32 %v610, %v616
      %v678 = vmul.f32 %v610, %v620
      %v679 = vmul.f32 %v610, %v624
      %v680 = vmul.f32 %v610, %v628
      %v681 = vmul.f32 %v610, %v632
      %v682 = vmul.f32 %v610, %v636
      %v683 = vmul.f32 %v610, %v640
      %v684 = vmul.f32 %v610, %v644
      %v685 = vadd.f32 %v556, %v653
      %v686 = vadd.f32 %v557, %v654
      %v687 = vadd.f32 %v558, %v655
      %v688 = vadd.f32 %v559, %v656
      %v689 = vadd.f32 %v560, %v657
      %v690 = vadd.f32 %v561, %v658
      %v691 = vadd.f32 %v562, %v659
      %v692 = vadd.f32 %v563, %v660
      %v693 = vadd.f32 %v564, %v661
      %v694 = vadd.f32 %v565, %v662
      %v695 = vadd.f32 %v566, %v663
      %v696 = vadd.f32 %v567, %v664
      %v697 = vadd.f32 %v568, %v665
      %v698 = vadd.f32 %v569, %v666
      %v699 = vadd.f32 %v570, %v667
      %v700 = vadd.f32 %v571, %v668
      %v701 = vadd.f32 %v572, %v669
      %v702 = vadd.f32 %v573, %v670
      %v703 = vadd.f32 %v574, %v671
      %v704 = vadd.f32 %v575, %v672
      %v705 = vadd.f32 %v576, %v673
      %v706 = vadd.f32 %v577, %v674
      %v707 = vadd.f32 %v578, %v675
      %v708 = vadd.f32 %v579, %v676
      %v709 = vadd.f32 %v580, %v677
      %v710 = vadd.f32 %v581, %v678
      %v711 = vadd.f32 %v582, %v679
      %v712 = vadd.f32 %v583, %v680
      %v713 = vadd.f32 %v584, %v681
      %v714 = vadd.f32 %v585, %v682
      %v715 = vadd.f32 %v586, %v683
      %v716 = vadd.f32 %v587, %v684
      %v717 = vld [vmem:[%s3] sm:$0xff]
      %v718 = vld [vmem:[%s3 + $0x8] sm:$0xff]
      %v719 = vld [vmem:[%s3 + $0x10] sm:$0xff]
      %v720 = vld [vmem:[%s3 + $0x18] sm:$0xff]
      %722 = vset.pattern.permute.xlu0 0
      %723 = vperm.xlu0 %722, %v717
      %v724 = vpop.permute.xlu0 %723
      %727 = vset.pattern.permute.xlu0 0
      %728 = vperm.xlu0 %727, %v718
      %v729 = vpop.permute.xlu0 %728
      %732 = vset.pattern.permute.xlu0 0
      %733 = vperm.xlu0 %732, %v719
      %v734 = vpop.permute.xlu0 %733
      %737 = vset.pattern.permute.xlu0 0
      %738 = vperm.xlu0 %737, %v720
      %v739 = vpop.permute.xlu0 %738
      %v745 = vlaneseq
      %v746 = vshrl.u32 %v745, 7
      %v747 = vsub.s32 0, %v746
      %v748 = vrot.slane %v431, %v747
      %v749 = vlaneseq
      %v750 = vshrl.u32 %v749, 7
      %v751 = vsub.s32 4, %v750
      %v752 = vrot.slane %v431, %v751
      %v753 = vlaneseq
      %v754 = vshrl.u32 %v753, 7
      %v755 = vsub.s32 0, %v754
      %v756 = vrot.slane %v432, %v755
      %v757 = vlaneseq
      %v758 = vshrl.u32 %v757, 7
      %v759 = vsub.s32 4, %v758
      %v760 = vrot.slane %v432, %v759
      %v761 = vlaneseq
      %v762 = vshrl.u32 %v761, 7
      %v763 = vsub.s32 0, %v762
      %v764 = vrot.slane %v433, %v763
      %v765 = vlaneseq
      %v766 = vshrl.u32 %v765, 7
      %v767 = vsub.s32 4, %v766
      %v768 = vrot.slane %v433, %v767
      %v769 = vlaneseq
      %v770 = vshrl.u32 %v769, 7
      %v771 = vsub.s32 0, %v770
      %v772 = vrot.slane %v434, %v771
      %v773 = vlaneseq
      %v774 = vshrl.u32 %v773, 7
      %v775 = vsub.s32 4, %v774
      %v776 = vrot.slane %v434, %v775
      %v785 = vlaneseq
      %v786 = vshrl.u32 %v785, 7
      %v787 = vsub.s32 0, %v786
      %v788 = vrot.slane %v748, %v787
      %v789 = vlaneseq
      %v790 = vshrl.u32 %v789, 7
      %v791 = vsub.s32 0, %v790
      %v792 = vrot.slane %v752, %v791
      %v793 = vlaneseq
      %v794 = vshrl.u32 %v793, 7
      %v795 = vsub.s32 0, %v794
      %v796 = vrot.slane %v756, %v795
      %v797 = vlaneseq
      %v798 = vshrl.u32 %v797, 7
      %v799 = vsub.s32 0, %v798
      %v800 = vrot.slane %v760, %v799
      %v801 = vlaneseq
      %v802 = vshrl.u32 %v801, 7
      %v803 = vsub.s32 0, %v802
      %v804 = vrot.slane %v764, %v803
      %v805 = vlaneseq
      %v806 = vshrl.u32 %v805, 7
      %v807 = vsub.s32 0, %v806
      %v808 = vrot.slane %v768, %v807
      %v809 = vlaneseq
      %v810 = vshrl.u32 %v809, 7
      %v811 = vsub.s32 0, %v810
      %v812 = vrot.slane %v772, %v811
      %v813 = vlaneseq
      %v814 = vshrl.u32 %v813, 7
      %v815 = vsub.s32 0, %v814
      %v816 = vrot.slane %v776, %v815
      %v817 = vmul.f32 %v724, %v788
      %v818 = vmul.f32 %v724, %v792
      %v819 = vmul.f32 %v724, %v796
      %v820 = vmul.f32 %v724, %v800
      %v821 = vmul.f32 %v724, %v804
      %v822 = vmul.f32 %v724, %v808
      %v823 = vmul.f32 %v724, %v812
      %v824 = vmul.f32 %v724, %v816
      %v825 = vmul.f32 %v729, %v788
      %v826 = vmul.f32 %v729, %v792
      %v827 = vmul.f32 %v729, %v796
      %v828 = vmul.f32 %v729, %v800
      %v829 = vmul.f32 %v729, %v804
      %v830 = vmul.f32 %v729, %v808
      %v831 = vmul.f32 %v729, %v812
      %v832 = vmul.f32 %v729, %v816
      %v833 = vmul.f32 %v734, %v788
      %v834 = vmul.f32 %v734, %v792
      %v835 = vmul.f32 %v734, %v796
      %v836 = vmul.f32 %v734, %v800
      %v837 = vmul.f32 %v734, %v804
      %v838 = vmul.f32 %v734, %v808
      %v839 = vmul.f32 %v734, %v812
      %v840 = vmul.f32 %v734, %v816
      %v841 = vmul.f32 %v739, %v788
      %v842 = vmul.f32 %v739, %v792
      %v843 = vmul.f32 %v739, %v796
      %v844 = vmul.f32 %v739, %v800
      %v845 = vmul.f32 %v739, %v804
      %v846 = vmul.f32 %v739, %v808
      %v847 = vmul.f32 %v739, %v812
      %v848 = vmul.f32 %v739, %v816
      %v849 = vadd.f32 %v685, %v817
      %v850 = vadd.f32 %v686, %v818
      %v851 = vadd.f32 %v687, %v819
      %v852 = vadd.f32 %v688, %v820
      %v853 = vadd.f32 %v689, %v821
      %v854 = vadd.f32 %v690, %v822
      %v855 = vadd.f32 %v691, %v823
      %v856 = vadd.f32 %v692, %v824
      %v857 = vadd.f32 %v693, %v825
      %v858 = vadd.f32 %v694, %v826
      %v859 = vadd.f32 %v695, %v827
      %v860 = vadd.f32 %v696, %v828
      %v861 = vadd.f32 %v697, %v829
      %v862 = vadd.f32 %v698, %v830
      %v863 = vadd.f32 %v699, %v831
      %v864 = vadd.f32 %v700, %v832
      %v865 = vadd.f32 %v701, %v833
      %v866 = vadd.f32 %v702, %v834
      %v867 = vadd.f32 %v703, %v835
      %v868 = vadd.f32 %v704, %v836
      %v869 = vadd.f32 %v705, %v837
      %v870 = vadd.f32 %v706, %v838
      %v871 = vadd.f32 %v707, %v839
      %v872 = vadd.f32 %v708, %v840
      %v873 = vadd.f32 %v709, %v841
      %v874 = vadd.f32 %v710, %v842
      %v875 = vadd.f32 %v711, %v843
      %v876 = vadd.f32 %v712, %v844
      %v877 = vadd.f32 %v713, %v845
      %v878 = vadd.f32 %v714, %v846
      %v879 = vadd.f32 %v715, %v847
      %v880 = vadd.f32 %v716, %v848
      %881 = vset.pattern.permute.xlu0 1
      %882 = vperm.xlu0 %881, %v717
      %v883 = vpop.permute.xlu0 %882
      %885 = vset.pattern.permute.xlu0 1
      %886 = vperm.xlu0 %885, %v718
      %v887 = vpop.permute.xlu0 %886
      %889 = vset.pattern.permute.xlu0 1
      %890 = vperm.xlu0 %889, %v719
      %v891 = vpop.permute.xlu0 %890
      %893 = vset.pattern.permute.xlu0 1
      %894 = vperm.xlu0 %893, %v720
      %v895 = vpop.permute.xlu0 %894
      %v897 = vlaneseq
      %v898 = vshrl.u32 %v897, 7
      %v899 = vsub.s32 1, %v898
      %v900 = vrot.slane %v431, %v899
      %v901 = vlaneseq
      %v902 = vshrl.u32 %v901, 7
      %v903 = vsub.s32 5, %v902
      %v904 = vrot.slane %v431, %v903
      %v905 = vlaneseq
      %v906 = vshrl.u32 %v905, 7
      %v907 = vsub.s32 1, %v906
      %v908 = vrot.slane %v432, %v907
      %v909 = vlaneseq
      %v910 = vshrl.u32 %v909, 7
      %v911 = vsub.s32 5, %v910
      %v912 = vrot.slane %v432, %v911
      %v913 = vlaneseq
      %v914 = vshrl.u32 %v913, 7
      %v915 = vsub.s32 1, %v914
      %v916 = vrot.slane %v433, %v915
      %v917 = vlaneseq
      %v918 = vshrl.u32 %v917, 7
      %v919 = vsub.s32 5, %v918
      %v920 = vrot.slane %v433, %v919
      %v921 = vlaneseq
      %v922 = vshrl.u32 %v921, 7
      %v923 = vsub.s32 1, %v922
      %v924 = vrot.slane %v434, %v923
      %v925 = vlaneseq
      %v926 = vshrl.u32 %v925, 7
      %v927 = vsub.s32 5, %v926
      %v928 = vrot.slane %v434, %v927
      %v937 = vlaneseq
      %v938 = vshrl.u32 %v937, 7
      %v939 = vsub.s32 1, %v938
      %v940 = vrot.slane %v900, %v939
      %v941 = vlaneseq
      %v942 = vshrl.u32 %v941, 7
      %v943 = vsub.s32 1, %v942
      %v944 = vrot.slane %v904, %v943
      %v945 = vlaneseq
      %v946 = vshrl.u32 %v945, 7
      %v947 = vsub.s32 1, %v946
      %v948 = vrot.slane %v908, %v947
      %v949 = vlaneseq
      %v950 = vshrl.u32 %v949, 7
      %v951 = vsub.s32 1, %v950
      %v952 = vrot.slane %v912, %v951
      %v953 = vlaneseq
      %v954 = vshrl.u32 %v953, 7
      %v955 = vsub.s32 1, %v954
      %v956 = vrot.slane %v916, %v955
      %v957 = vlaneseq
      %v958 = vshrl.u32 %v957, 7
      %v959 = vsub.s32 1, %v958
      %v960 = vrot.slane %v920, %v959
      %v961 = vlaneseq
      %v962 = vshrl.u32 %v961, 7
      %v963 = vsub.s32 1, %v962
      %v964 = vrot.slane %v924, %v963
      %v965 = vlaneseq
      %v966 = vshrl.u32 %v965, 7
      %v967 = vsub.s32 1, %v966
      %v968 = vrot.slane %v928, %v967
      %v969 = vmul.f32 %v883, %v940
      %v970 = vmul.f32 %v883, %v944
      %v971 = vmul.f32 %v883, %v948
      %v972 = vmul.f32 %v883, %v952
      %v973 = vmul.f32 %v883, %v956
      %v974 = vmul.f32 %v883, %v960
      %v975 = vmul.f32 %v883, %v964
      %v976 = vmul.f32 %v883, %v968
      %v977 = vmul.f32 %v887, %v940
      %v978 = vmul.f32 %v887, %v944
      %v979 = vmul.f32 %v887, %v948
      %v980 = vmul.f32 %v887, %v952
      %v981 = vmul.f32 %v887, %v956
      %v982 = vmul.f32 %v887, %v960
      %v983 = vmul.f32 %v887, %v964
      %v984 = vmul.f32 %v887, %v968
      %v985 = vmul.f32 %v891, %v940
      %v986 = vmul.f32 %v891, %v944
      %v987 = vmul.f32 %v891, %v948
      %v988 = vmul.f32 %v891, %v952
      %v989 = vmul.f32 %v891, %v956
      %v990 = vmul.f32 %v891, %v960
      %v991 = vmul.f32 %v891, %v964
      %v992 = vmul.f32 %v891, %v968
      %v993 = vmul.f32 %v895, %v940
      %v994 = vmul.f32 %v895, %v944
      %v995 = vmul.f32 %v895, %v948
      %v996 = vmul.f32 %v895, %v952
      %v997 = vmul.f32 %v895, %v956
      %v998 = vmul.f32 %v895, %v960
      %v999 = vmul.f32 %v895, %v964
      %v1000 = vmul.f32 %v895, %v968
      %v1001 = vadd.f32 %v849, %v969
      %v1002 = vadd.f32 %v850, %v970
      %v1003 = vadd.f32 %v851, %v971
      %v1004 = vadd.f32 %v852, %v972
      %v1005 = vadd.f32 %v853, %v973
      %v1006 = vadd.f32 %v854, %v974
      %v1007 = vadd.f32 %v855, %v975
      %v1008 = vadd.f32 %v856, %v976
      %v1009 = vadd.f32 %v857, %v977
      %v1010 = vadd.f32 %v858, %v978
      %v1011 = vadd.f32 %v859, %v979
      %v1012 = vadd.f32 %v860, %v980
      %v1013 = vadd.f32 %v861, %v981
      %v1014 = vadd.f32 %v862, %v982
      %v1015 = vadd.f32 %v863, %v983
      %v1016 = vadd.f32 %v864, %v984
      %v1017 = vadd.f32 %v865, %v985
      %v1018 = vadd.f32 %v866, %v986
      %v1019 = vadd.f32 %v867, %v987
      %v1020 = vadd.f32 %v868, %v988
      %v1021 = vadd.f32 %v869, %v989
      %v1022 = vadd.f32 %v870, %v990
      %v1023 = vadd.f32 %v871, %v991
      %v1024 = vadd.f32 %v872, %v992
      %v1025 = vadd.f32 %v873, %v993
      %v1026 = vadd.f32 %v874, %v994
      %v1027 = vadd.f32 %v875, %v995
      %v1028 = vadd.f32 %v876, %v996
      %v1029 = vadd.f32 %v877, %v997
      %v1030 = vadd.f32 %v878, %v998
      %v1031 = vadd.f32 %v879, %v999
      %v1032 = vadd.f32 %v880, %v1000
      %1033 = vset.pattern.permute.xlu0 2
      %1034 = vperm.xlu0 %1033, %v717
      %v1035 = vpop.permute.xlu0 %1034
      %1037 = vset.pattern.permute.xlu0 2
      %1038 = vperm.xlu0 %1037, %v718
      %v1039 = vpop.permute.xlu0 %1038
      %1041 = vset.pattern.permute.xlu0 2
      %1042 = vperm.xlu0 %1041, %v719
      %v1043 = vpop.permute.xlu0 %1042
      %1045 = vset.pattern.permute.xlu0 2
      %1046 = vperm.xlu0 %1045, %v720
      %v1047 = vpop.permute.xlu0 %1046
      %v1049 = vlaneseq
      %v1050 = vshrl.u32 %v1049, 7
      %v1051 = vsub.s32 2, %v1050
      %v1052 = vrot.slane %v431, %v1051
      %v1053 = vlaneseq
      %v1054 = vshrl.u32 %v1053, 7
      %v1055 = vsub.s32 6, %v1054
      %v1056 = vrot.slane %v431, %v1055
      %v1057 = vlaneseq
      %v1058 = vshrl.u32 %v1057, 7
      %v1059 = vsub.s32 2, %v1058
      %v1060 = vrot.slane %v432, %v1059
      %v1061 = vlaneseq
      %v1062 = vshrl.u32 %v1061, 7
      %v1063 = vsub.s32 6, %v1062
      %v1064 = vrot.slane %v432, %v1063
      %v1065 = vlaneseq
      %v1066 = vshrl.u32 %v1065, 7
      %v1067 = vsub.s32 2, %v1066
      %v1068 = vrot.slane %v433, %v1067
      %v1069 = vlaneseq
      %v1070 = vshrl.u32 %v1069, 7
      %v1071 = vsub.s32 6, %v1070
      %v1072 = vrot.slane %v433, %v1071
      %v1073 = vlaneseq
      %v1074 = vshrl.u32 %v1073, 7
      %v1075 = vsub.s32 2, %v1074
      %v1076 = vrot.slane %v434, %v1075
      %v1077 = vlaneseq
      %v1078 = vshrl.u32 %v1077, 7
      %v1079 = vsub.s32 6, %v1078
      %v1080 = vrot.slane %v434, %v1079
      %v1089 = vlaneseq
      %v1090 = vshrl.u32 %v1089, 7
      %v1091 = vsub.s32 2, %v1090
      %v1092 = vrot.slane %v1052, %v1091
      %v1093 = vlaneseq
      %v1094 = vshrl.u32 %v1093, 7
      %v1095 = vsub.s32 2, %v1094
      %v1096 = vrot.slane %v1056, %v1095
      %v1097 = vlaneseq
      %v1098 = vshrl.u32 %v1097, 7
      %v1099 = vsub.s32 2, %v1098
      %v1100 = vrot.slane %v1060, %v1099
      %v1101 = vlaneseq
      %v1102 = vshrl.u32 %v1101, 7
      %v1103 = vsub.s32 2, %v1102
      %v1104 = vrot.slane %v1064, %v1103
      %v1105 = vlaneseq
      %v1106 = vshrl.u32 %v1105, 7
      %v1107 = vsub.s32 2, %v1106
      %v1108 = vrot.slane %v1068, %v1107
      %v1109 = vlaneseq
      %v1110 = vshrl.u32 %v1109, 7
      %v1111 = vsub.s32 2, %v1110
      %v1112 = vrot.slane %v1072, %v1111
      %v1113 = vlaneseq
      %v1114 = vshrl.u32 %v1113, 7
      %v1115 = vsub.s32 2, %v1114
      %v1116 = vrot.slane %v1076, %v1115
      %v1117 = vlaneseq
      %v1118 = vshrl.u32 %v1117, 7
      %v1119 = vsub.s32 2, %v1118
      %v1120 = vrot.slane %v1080, %v1119
      %v1121 = vmul.f32 %v1035, %v1092
      %v1122 = vmul.f32 %v1035, %v1096
      %v1123 = vmul.f32 %v1035, %v1100
      %v1124 = vmul.f32 %v1035, %v1104
      %v1125 = vmul.f32 %v1035, %v1108
      %v1126 = vmul.f32 %v1035, %v1112
      %v1127 = vmul.f32 %v1035, %v1116
      %v1128 = vmul.f32 %v1035, %v1120
      %v1129 = vmul.f32 %v1039, %v1092
      %v1130 = vmul.f32 %v1039, %v1096
      %v1131 = vmul.f32 %v1039, %v1100
      %v1132 = vmul.f32 %v1039, %v1104
      %v1133 = vmul.f32 %v1039, %v1108
      %v1134 = vmul.f32 %v1039, %v1112
      %v1135 = vmul.f32 %v1039, %v1116
      %v1136 = vmul.f32 %v1039, %v1120
      %v1137 = vmul.f32 %v1043, %v1092
      %v1138 = vmul.f32 %v1043, %v1096
      %v1139 = vmul.f32 %v1043, %v1100
      %v1140 = vmul.f32 %v1043, %v1104
      %v1141 = vmul.f32 %v1043, %v1108
      %v1142 = vmul.f32 %v1043, %v1112
      %v1143 = vmul.f32 %v1043, %v1116
      %v1144 = vmul.f32 %v1043, %v1120
      %v1145 = vmul.f32 %v1047, %v1092
      %v1146 = vmul.f32 %v1047, %v1096
      %v1147 = vmul.f32 %v1047, %v1100
      %v1148 = vmul.f32 %v1047, %v1104
      %v1149 = vmul.f32 %v1047, %v1108
      %v1150 = vmul.f32 %v1047, %v1112
      %v1151 = vmul.f32 %v1047, %v1116
      %v1152 = vmul.f32 %v1047, %v1120
      %v1153 = vadd.f32 %v1001, %v1121
      %v1154 = vadd.f32 %v1002, %v1122
      %v1155 = vadd.f32 %v1003, %v1123
      %v1156 = vadd.f32 %v1004, %v1124
      %v1157 = vadd.f32 %v1005, %v1125
      %v1158 = vadd.f32 %v1006, %v1126
      %v1159 = vadd.f32 %v1007, %v1127
      %v1160 = vadd.f32 %v1008, %v1128
      %v1161 = vadd.f32 %v1009, %v1129
      %v1162 = vadd.f32 %v1010, %v1130
      %v1163 = vadd.f32 %v1011, %v1131
      %v1164 = vadd.f32 %v1012, %v1132
      %v1165 = vadd.f32 %v1013, %v1133
      %v1166 = vadd.f32 %v1014, %v1134
      %v1167 = vadd.f32 %v1015, %v1135
      %v1168 = vadd.f32 %v1016, %v1136
      %v1169 = vadd.f32 %v1017, %v1137
      %v1170 = vadd.f32 %v1018, %v1138
      %v1171 = vadd.f32 %v1019, %v1139
      %v1172 = vadd.f32 %v1020, %v1140
      %v1173 = vadd.f32 %v1021, %v1141
      %v1174 = vadd.f32 %v1022, %v1142
      %v1175 = vadd.f32 %v1023, %v1143
      %v1176 = vadd.f32 %v1024, %v1144
      %v1177 = vadd.f32 %v1025, %v1145
      %v1178 = vadd.f32 %v1026, %v1146
      %v1179 = vadd.f32 %v1027, %v1147
      %v1180 = vadd.f32 %v1028, %v1148
      %v1181 = vadd.f32 %v1029, %v1149
      %v1182 = vadd.f32 %v1030, %v1150
      %v1183 = vadd.f32 %v1031, %v1151
      %v1184 = vadd.f32 %v1032, %v1152
      %1185 = vset.pattern.permute.xlu0 3
      %1186 = vperm.xlu0 %1185, %v717
      %v1187 = vpop.permute.xlu0 %1186
      %1189 = vset.pattern.permute.xlu0 3
      %1190 = vperm.xlu0 %1189, %v718
      %v1191 = vpop.permute.xlu0 %1190
      %1193 = vset.pattern.permute.xlu0 3
      %1194 = vperm.xlu0 %1193, %v719
      %v1195 = vpop.permute.xlu0 %1194
      %1197 = vset.pattern.permute.xlu0 3
      %1198 = vperm.xlu0 %1197, %v720
      %v1199 = vpop.permute.xlu0 %1198
      %v1201 = vlaneseq
      %v1202 = vshrl.u32 %v1201, 7
      %v1203 = vsub.s32 3, %v1202
      %v1204 = vrot.slane %v431, %v1203
      %v1205 = vlaneseq
      %v1206 = vshrl.u32 %v1205, 7
      %v1207 = vsub.s32 7, %v1206
      %v1208 = vrot.slane %v431, %v1207
      %v1209 = vlaneseq
      %v1210 = vshrl.u32 %v1209, 7
      %v1211 = vsub.s32 3, %v1210
      %v1212 = vrot.slane %v432, %v1211
      %v1213 = vlaneseq
      %v1214 = vshrl.u32 %v1213, 7
      %v1215 = vsub.s32 7, %v1214
      %v1216 = vrot.slane %v432, %v1215
      %v1217 = vlaneseq
      %v1218 = vshrl.u32 %v1217, 7
      %v1219 = vsub.s32 3, %v1218
      %v1220 = vrot.slane %v433, %v1219
      %v1221 = vlaneseq
      %v1222 = vshrl.u32 %v1221, 7
      %v1223 = vsub.s32 7, %v1222
      %v1224 = vrot.slane %v433, %v1223
      %v1225 = vlaneseq
      %v1226 = vshrl.u32 %v1225, 7
      %v1227 = vsub.s32 3, %v1226
      %v1228 = vrot.slane %v434, %v1227
      %v1229 = vlaneseq
      %v1230 = vshrl.u32 %v1229, 7
      %v1231 = vsub.s32 7, %v1230
      %v1232 = vrot.slane %v434, %v1231
      %v1241 = vlaneseq
      %v1242 = vshrl.u32 %v1241, 7
      %v1243 = vsub.s32 3, %v1242
      %v1244 = vrot.slane %v1204, %v1243
      %v1245 = vlaneseq
      %v1246 = vshrl.u32 %v1245, 7
      %v1247 = vsub.s32 3, %v1246
      %v1248 = vrot.slane %v1208, %v1247
      %v1249 = vlaneseq
      %v1250 = vshrl.u32 %v1249, 7
      %v1251 = vsub.s32 3, %v1250
      %v1252 = vrot.slane %v1212, %v1251
      %v1253 = vlaneseq
      %v1254 = vshrl.u32 %v1253, 7
      %v1255 = vsub.s32 3, %v1254
      %v1256 = vrot.slane %v1216, %v1255
      %v1257 = vlaneseq
      %v1258 = vshrl.u32 %v1257, 7
      %v1259 = vsub.s32 3, %v1258
      %v1260 = vrot.slane %v1220, %v1259
      %v1261 = vlaneseq
      %v1262 = vshrl.u32 %v1261, 7
      %v1263 = vsub.s32 3, %v1262
      %v1264 = vrot.slane %v1224, %v1263
      %v1265 = vlaneseq
      %v1266 = vshrl.u32 %v1265, 7
      %v1267 = vsub.s32 3, %v1266
      %v1268 = vrot.slane %v1228, %v1267
      %v1269 = vlaneseq
      %v1270 = vshrl.u32 %v1269, 7
      %v1271 = vsub.s32 3, %v1270
      %v1272 = vrot.slane %v1232, %v1271
      %v1273 = vmul.f32 %v1187, %v1244
      %v1274 = vmul.f32 %v1187, %v1248
      %v1275 = vmul.f32 %v1187, %v1252
      %v1276 = vmul.f32 %v1187, %v1256
      %v1277 = vmul.f32 %v1187, %v1260
      %v1278 = vmul.f32 %v1187, %v1264
      %v1279 = vmul.f32 %v1187, %v1268
      %v1280 = vmul.f32 %v1187, %v1272
      %v1281 = vmul.f32 %v1191, %v1244
      %v1282 = vmul.f32 %v1191, %v1248
      %v1283 = vmul.f32 %v1191, %v1252
      %v1284 = vmul.f32 %v1191, %v1256
      %v1285 = vmul.f32 %v1191, %v1260
      %v1286 = vmul.f32 %v1191, %v1264
      %v1287 = vmul.f32 %v1191, %v1268
      %v1288 = vmul.f32 %v1191, %v1272
      %v1289 = vmul.f32 %v1195, %v1244
      %v1290 = vmul.f32 %v1195, %v1248
      %v1291 = vmul.f32 %v1195, %v1252
      %v1292 = vmul.f32 %v1195, %v1256
      %v1293 = vmul.f32 %v1195, %v1260
      %v1294 = vmul.f32 %v1195, %v1264
      %v1295 = vmul.f32 %v1195, %v1268
      %v1296 = vmul.f32 %v1195, %v1272
      %v1297 = vmul.f32 %v1199, %v1244
      %v1298 = vmul.f32 %v1199, %v1248
      %v1299 = vmul.f32 %v1199, %v1252
      %v1300 = vmul.f32 %v1199, %v1256
      %v1301 = vmul.f32 %v1199, %v1260
      %v1302 = vmul.f32 %v1199, %v1264
      %v1303 = vmul.f32 %v1199, %v1268
      %v1304 = vmul.f32 %v1199, %v1272
      %v1305 = vadd.f32 %v1153, %v1273
      %v1306 = vadd.f32 %v1154, %v1274
      %v1307 = vadd.f32 %v1155, %v1275
      %v1308 = vadd.f32 %v1156, %v1276
      %v1309 = vadd.f32 %v1157, %v1277
      %v1310 = vadd.f32 %v1158, %v1278
      %v1311 = vadd.f32 %v1159, %v1279
      %v1312 = vadd.f32 %v1160, %v1280
      %v1313 = vadd.f32 %v1161, %v1281
      %v1314 = vadd.f32 %v1162, %v1282
      %v1315 = vadd.f32 %v1163, %v1283
      %v1316 = vadd.f32 %v1164, %v1284
      %v1317 = vadd.f32 %v1165, %v1285
      %v1318 = vadd.f32 %v1166, %v1286
      %v1319 = vadd.f32 %v1167, %v1287
      %v1320 = vadd.f32 %v1168, %v1288
      %v1321 = vadd.f32 %v1169, %v1289
      %v1322 = vadd.f32 %v1170, %v1290
      %v1323 = vadd.f32 %v1171, %v1291
      %v1324 = vadd.f32 %v1172, %v1292
      %v1325 = vadd.f32 %v1173, %v1293
      %v1326 = vadd.f32 %v1174, %v1294
      %v1327 = vadd.f32 %v1175, %v1295
      %v1328 = vadd.f32 %v1176, %v1296
      %v1329 = vadd.f32 %v1177, %v1297
      %v1330 = vadd.f32 %v1178, %v1298
      %v1331 = vadd.f32 %v1179, %v1299
      %v1332 = vadd.f32 %v1180, %v1300
      %v1333 = vadd.f32 %v1181, %v1301
      %v1334 = vadd.f32 %v1182, %v1302
      %v1335 = vadd.f32 %v1183, %v1303
      %v1336 = vadd.f32 %v1184, %v1304
      %v1337 = vmax.f32 %v1305, 0.0
      %v1338 = vmax.f32 %v1306, 0.0
      %v1339 = vmax.f32 %v1307, 0.0
      %v1340 = vmax.f32 %v1308, 0.0
      %v1341 = vmax.f32 %v1309, 0.0
      %v1342 = vmax.f32 %v1310, 0.0
      %v1343 = vmax.f32 %v1311, 0.0
      %v1344 = vmax.f32 %v1312, 0.0
      %v1345 = vmax.f32 %v1313, 0.0
      %v1346 = vmax.f32 %v1314, 0.0
      %v1347 = vmax.f32 %v1315, 0.0
      %v1348 = vmax.f32 %v1316, 0.0
      %v1349 = vmax.f32 %v1317, 0.0
      %v1350 = vmax.f32 %v1318, 0.0
      %v1351 = vmax.f32 %v1319, 0.0
      %v1352 = vmax.f32 %v1320, 0.0
      %v1353 = vmax.f32 %v1321, 0.0
      %v1354 = vmax.f32 %v1322, 0.0
      %v1355 = vmax.f32 %v1323, 0.0
      %v1356 = vmax.f32 %v1324, 0.0
      %v1357 = vmax.f32 %v1325, 0.0
      %v1358 = vmax.f32 %v1326, 0.0
      %v1359 = vmax.f32 %v1327, 0.0
      %v1360 = vmax.f32 %v1328, 0.0
      %v1361 = vmax.f32 %v1329, 0.0
      %v1362 = vmax.f32 %v1330, 0.0
      %v1363 = vmax.f32 %v1331, 0.0
      %v1364 = vmax.f32 %v1332, 0.0
      %v1365 = vmax.f32 %v1333, 0.0
      %v1366 = vmax.f32 %v1334, 0.0
      %v1367 = vmax.f32 %v1335, 0.0
      %v1368 = vmax.f32 %v1336, 0.0
      %v1369 = vld [vmem:[%s7] sm:$0xff]
      %v1370 = vld [vmem:[%s7 + $0x8] sm:$0xff]
      %v1371 = vld [vmem:[%s8] sm:$0xff]
      %v1372 = vld [vmem:[%s8 + $0x8] sm:$0xff]
      %1374 = vset.pattern.permute.xlu0 0
      %1375 = vperm.xlu0 %1374, %v1371
      %v1376 = vpop.permute.xlu0 %1375
      %1379 = vset.pattern.permute.xlu0 0
      %1380 = vperm.xlu0 %1379, %v1372
      %v1381 = vpop.permute.xlu0 %1380
      %vm1383 = vcmask 261120
      %v1385 = vsel %vm1383, %v1369, 0
      %v1388 = vsel %vm1383, %v1370, 0
      %1390 = vmatprep.subr.mxu0 %v1338
      %1391 = vmatpush1.msra.mxu0 %v1337
      %1392 = vmatprep.subr.mxu0 %v1346
      %1393 = vmatpush1.msra.mxu0 %v1345
      %1394 = vmatprep.subr.mxu0 %v1354
      %1395 = vmatpush1.msra.mxu0 %v1353
      %1396 = vmatprep.subr.mxu0 %v1362
      %1397 = vmatpush1.msra.mxu0 %v1361
      %1398 = vmatprep.subr.mxu0 0.0
      %1399 = vmatpush1.msra.mxu0 0.0
      %1400 = vmatprep.subr.mxu0 0.0
      %1401 = vmatpush1.msra.mxu0 0.0
      %1402 = vmatprep.subr.mxu0 0.0
      %1403 = vmatpush1.msra.mxu0 0.0
      %1404 = vmatprep.subr.mxu0 0.0
      %1405 = vmatpush1.msra.mxu0 0.0
      %1406 = vmatprep.subr.mxu0 0.0
      %1407 = vmatpush1.msra.mxu0 0.0
      %1408 = vmatprep.subr.mxu0 0.0
      %1409 = vmatpush1.msra.mxu0 0.0
      %1410 = vmatprep.subr.mxu0 0.0
      %1411 = vmatpush1.msra.mxu0 0.0
      %1412 = vmatprep.subr.mxu0 0.0
      %1413 = vmatpush1.msra.mxu0 0.0
      %1414 = vmatprep.subr.mxu0 0.0
      %1415 = vmatpush1.msra.mxu0 0.0
      %1416 = vmatprep.subr.mxu0 0.0
      %1417 = vmatpush1.msra.mxu0 0.0
      %1418 = vmatprep.subr.mxu0 0.0
      %1419 = vmatpush1.msra.mxu0 0.0
      %1420 = vmatprep.subr.mxu0 0.0
      %1421 = vmatpush1.msra.mxu0 0.0
      %1422 = vmatprep.subr.mxu0 0.0
      %1423 = vmatpush1.msra.mxu0 0.0
      %1424 = vmatprep.subr.mxu0 0.0
      %1425 = vmatpush1.msra.mxu0 0.0
      %1426 = vmatprep.subr.mxu0 0.0
      %1427 = vmatpush1.msra.mxu0 0.0
      %1428 = vmatprep.subr.mxu0 0.0
      %1429 = vmatpush1.msra.mxu0 0.0
      %1430 = vmatprep.subr.mxu0 0.0
      %1431 = vmatpush1.msra.mxu0 0.0
      %1432 = vmatprep.subr.mxu0 0.0
      %1433 = vmatpush1.msra.mxu0 0.0
      %1434 = vmatprep.subr.mxu0 0.0
      %1435 = vmatpush1.msra.mxu0 0.0
      %1436 = vmatprep.subr.mxu0 0.0
      %1437 = vmatpush1.msra.mxu0 0.0
      %1438 = vmatprep.subr.mxu0 0.0
      %1439 = vmatpush1.msra.mxu0 0.0
      %1440 = vmatprep.subr.mxu0 0.0
      %1441 = vmatpush1.msra.mxu0 0.0
      %1442 = vmatprep.subr.mxu0 0.0
      %1443 = vmatpush1.msra.mxu0 0.0
      %1444 = vmatprep.subr.mxu0 0.0
      %1445 = vmatpush1.msra.mxu0 0.0
      %1446 = vmatprep.subr.mxu0 0.0
      %1447 = vmatpush1.msra.mxu0 0.0
      %1448 = vmatprep.subr.mxu0 0.0
      %1449 = vmatpush1.msra.mxu0 0.0
      %1450 = vmatprep.subr.mxu0 0.0
      %1451 = vmatpush1.msra.mxu0 0.0
      %1452 = vmatprep.subr.mxu0 0.0
      %1453 = vmatpush1.msra.mxu0 0.0
      %1454 = vmatprep.mubr.f32.mxu0 0.0
      %1455 = vmatmul.mubr.f32.gmra.mrb[0].mxu0 %v1385
      %v1456 = vpop.f32.mrb[0].mxu0
      %v1457 = vadd.f32 %v1376, %v1456
      %v1458 = vpop.f32.mrb[0].mxu0
      %v1459 = vadd.f32 %v1376, %v1458
      %1460 = vmatprep.mubr.f32.mxu0 0.0
      %1461 = vmatmul.mubr.f32.gmra.mrb[0].mxu0 %v1388
      %v1462 = vpop.f32.mrb[0].mxu0
      %v1463 = vadd.f32 %v1381, %v1462
      %v1464 = vpop.f32.mrb[0].mxu0
      %v1465 = vadd.f32 %v1381, %v1464
      %1466 = vdwg.mxu0
      %1467 = vmatprep.subr.mxu0 %v1340
      %1468 = vmatpush1.msra.mxu0 %v1339
      %1469 = vmatprep.subr.mxu0 %v1348
      %1470 = vmatpush1.msra.mxu0 %v1347
      %1471 = vmatprep.subr.mxu0 %v1356
      %1472 = vmatpush1.msra.mxu0 %v1355
      %1473 = vmatprep.subr.mxu0 %v1364
      %1474 = vmatpush1.msra.mxu0 %v1363
      %1475 = vmatprep.subr.mxu0 0.0
      %1476 = vmatpush1.msra.mxu0 0.0
      %1477 = vmatprep.subr.mxu0 0.0
      %1478 = vmatpush1.msra.mxu0 0.0
      %1479 = vmatprep.subr.mxu0 0.0
      %1480 = vmatpush1.msra.mxu0 0.0
      %1481 = vmatprep.subr.mxu0 0.0
      %1482 = vmatpush1.msra.mxu0 0.0
      %1483 = vmatprep.subr.mxu0 0.0
      %1484 = vmatpush1.msra.mxu0 0.0
      %1485 = vmatprep.subr.mxu0 0.0
      %1486 = vmatpush1.msra.mxu0 0.0
      %1487 = vmatprep.subr.mxu0 0.0
      %1488 = vmatpush1.msra.mxu0 0.0
      %1489 = vmatprep.subr.mxu0 0.0
      %1490 = vmatpush1.msra.mxu0 0.0
      %1491 = vmatprep.subr.mxu0 0.0
      %1492 = vmatpush1.msra.mxu0 0.0
      %1493 = vmatprep.subr.mxu0 0.0
      %1494 = vmatpush1.msra.mxu0 0.0
      %1495 = vmatprep.subr.mxu0 0.0
      %1496 = vmatpush1.msra.mxu0 0.0
      %1497 = vmatprep.subr.mxu0 0.0
      %1498 = vmatpush1.msra.mxu0 0.0
      %1499 = vmatprep.subr.mxu0 0.0
      %1500 = vmatpush1.msra.mxu0 0.0
      %1501 = vmatprep.subr.mxu0 0.0
      %1502 = vmatpush1.msra.mxu0 0.0
      %1503 = vmatprep.subr.mxu0 0.0
      %1504 = vmatpush1.msra.mxu0 0.0
      %1505 = vmatprep.subr.mxu0 0.0
      %1506 = vmatpush1.msra.mxu0 0.0
      %1507 = vmatprep.subr.mxu0 0.0
      %1508 = vmatpush1.msra.mxu0 0.0
      %1509 = vmatprep.subr.mxu0 0.0
      %1510 = vmatpush1.msra.mxu0 0.0
      %1511 = vmatprep.subr.mxu0 0.0
      %1512 = vmatpush1.msra.mxu0 0.0
      %1513 = vmatprep.subr.mxu0 0.0
      %1514 = vmatpush1.msra.mxu0 0.0
      %1515 = vmatprep.subr.mxu0 0.0
      %1516 = vmatpush1.msra.mxu0 0.0
      %1517 = vmatprep.subr.mxu0 0.0
      %1518 = vmatpush1.msra.mxu0 0.0
      %1519 = vmatprep.subr.mxu0 0.0
      %1520 = vmatpush1.msra.mxu0 0.0
      %1521 = vmatprep.subr.mxu0 0.0
      %1522 = vmatpush1.msra.mxu0 0.0
      %1523 = vmatprep.subr.mxu0 0.0
      %1524 = vmatpush1.msra.mxu0 0.0
      %1525 = vmatprep.subr.mxu0 0.0
      %1526 = vmatpush1.msra.mxu0 0.0
      %1527 = vmatprep.subr.mxu0 0.0
      %1528 = vmatpush1.msra.mxu0 0.0
      %1529 = vmatprep.subr.mxu0 0.0
      %1530 = vmatpush1.msra.mxu0 0.0
      %1531 = vmatprep.mubr.f32.mxu0 0.0
      %1532 = vmatmul.mubr.f32.gmra.mrb[0].mxu0 %v1385
      %v1533 = vpop.f32.mrb[0].mxu0
      %v1534 = vadd.f32 %v1376, %v1533
      %v1535 = vpop.f32.mrb[0].mxu0
      %v1536 = vadd.f32 %v1376, %v1535
      %1537 = vmatprep.mubr.f32.mxu0 0.0
      %1538 = vmatmul.mubr.f32.gmra.mrb[0].mxu0 %v1388
      %v1539 = vpop.f32.mrb[0].mxu0
      %v1540 = vadd.f32 %v1381, %v1539
      %v1541 = vpop.f32.mrb[0].mxu0
      %v1542 = vadd.f32 %v1381, %v1541
      %1543 = vdwg.mxu0
      %1544 = vmatprep.subr.mxu0 %v1342
      %1545 = vmatpush1.msra.mxu0 %v1341
      %1546 = vmatprep.subr.mxu0 %v1350
      %1547 = vmatpush1.msra.mxu0 %v1349
      %1548 = vmatprep.subr.mxu0 %v1358
      %1549 = vmatpush1.msra.mxu0 %v1357
      %1550 = vmatprep.subr.mxu0 %v1366
      %1551 = vmatpush1.msra.mxu0 %v1365
      %1552 = vmatprep.subr.mxu0 0.0
      %1553 = vmatpush1.msra.mxu0 0.0
      %1554 = vmatprep.subr.mxu0 0.0
      %1555 = vmatpush1.msra.mxu0 0.0
      %1556 = vmatprep.subr.mxu0 0.0
      %1557 = vmatpush1.msra.mxu0 0.0
      %1558 = vmatprep.subr.mxu0 0.0
      %1559 = vmatpush1.msra.mxu0 0.0
      %1560 = vmatprep.subr.mxu0 0.0
      %1561 = vmatpush1.msra.mxu0 0.0
      %1562 = vmatprep.subr.mxu0 0.0
      %1563 = vmatpush1.msra.mxu0 0.0
      %1564 = vmatprep.subr.mxu0 0.0
      %1565 = vmatpush1.msra.mxu0 0.0
      %1566 = vmatprep.subr.mxu0 0.0
      %1567 = vmatpush1.msra.mxu0 0.0
      %1568 = vmatprep.subr.mxu0 0.0
      %1569 = vmatpush1.msra.mxu0 0.0
      %1570 = vmatprep.subr.mxu0 0.0
      %1571 = vmatpush1.msra.mxu0 0.0
      %1572 = vmatprep.subr.mxu0 0.0
      %1573 = vmatpush1.msra.mxu0 0.0
      %1574 = vmatprep.subr.mxu0 0.0
      %1575 = vmatpush1.msra.mxu0 0.0
      %1576 = vmatprep.subr.mxu0 0.0
      %1577 = vmatpush1.msra.mxu0 0.0
      %1578 = vmatprep.subr.mxu0 0.0
      %1579 = vmatpush1.msra.mxu0 0.0
      %1580 = vmatprep.subr.mxu0 0.0
      %1581 = vmatpush1.msra.mxu0 0.0
      %1582 = vmatprep.subr.mxu0 0.0
      %1583 = vmatpush1.msra.mxu0 0.0
      %1584 = vmatprep.subr.mxu0 0.0
      %1585 = vmatpush1.msra.mxu0 0.0
      %1586 = vmatprep.subr.mxu0 0.0
      %1587 = vmatpush1.msra.mxu0 0.0
      %1588 = vmatprep.subr.mxu0 0.0
      %1589 = vmatpush1.msra.mxu0 0.0
      %1590 = vmatprep.subr.mxu0 0.0
      %1591 = vmatpush1.msra.mxu0 0.0
      %1592 = vmatprep.subr.mxu0 0.0
      %1593 = vmatpush1.msra.mxu0 0.0
      %1594 = vmatprep.subr.mxu0 0.0
      %1595 = vmatpush1.msra.mxu0 0.0
      %1596 = vmatprep.subr.mxu0 0.0
      %1597 = vmatpush1.msra.mxu0 0.0
      %1598 = vmatprep.subr.mxu0 0.0
      %1599 = vmatpush1.msra.mxu0 0.0
      %1600 = vmatprep.subr.mxu0 0.0
      %1601 = vmatpush1.msra.mxu0 0.0
      %1602 = vmatprep.subr.mxu0 0.0
      %1603 = vmatpush1.msra.mxu0 0.0
      %1604 = vmatprep.subr.mxu0 0.0
      %1605 = vmatpush1.msra.mxu0 0.0
      %1606 = vmatprep.subr.mxu0 0.0
      %1607 = vmatpush1.msra.mxu0 0.0
      %1608 = vmatprep.mubr.f32.mxu0 0.0
      %1609 = vmatmul.mubr.f32.gmra.mrb[0].mxu0 %v1385
      %v1610 = vpop.f32.mrb[0].mxu0
      %v1611 = vadd.f32 %v1376, %v1610
      %v1612 = vpop.f32.mrb[0].mxu0
      %v1613 = vadd.f32 %v1376, %v1612
      %1614 = vmatprep.mubr.f32.mxu0 0.0
      %1615 = vmatmul.mubr.f32.gmra.mrb[0].mxu0 %v1388
      %v1616 = vpop.f32.mrb[0].mxu0
      %v1617 = vadd.f32 %v1381, %v1616
      %v1618 = vpop.f32.mrb[0].mxu0
      %v1619 = vadd.f32 %v1381, %v1618
      %1620 = vdwg.mxu0
      %1621 = vmatprep.subr.mxu0 %v1344
      %1622 = vmatpush1.msra.mxu0 %v1343
      %1623 = vmatprep.subr.mxu0 %v1352
      %1624 = vmatpush1.msra.mxu0 %v1351
      %1625 = vmatprep.subr.mxu0 %v1360
      %1626 = vmatpush1.msra.mxu0 %v1359
      %1627 = vmatprep.subr.mxu0 %v1368
      %1628 = vmatpush1.msra.mxu0 %v1367
      %1629 = vmatprep.subr.mxu0 0.0
      %1630 = vmatpush1.msra.mxu0 0.0
      %1631 = vmatprep.subr.mxu0 0.0
      %1632 = vmatpush1.msra.mxu0 0.0
      %1633 = vmatprep.subr.mxu0 0.0
      %1634 = vmatpush1.msra.mxu0 0.0
      %1635 = vmatprep.subr.mxu0 0.0
      %1636 = vmatpush1.msra.mxu0 0.0
      %1637 = vmatprep.subr.mxu0 0.0
      %1638 = vmatpush1.msra.mxu0 0.0
      %1639 = vmatprep.subr.mxu0 0.0
      %1640 = vmatpush1.msra.mxu0 0.0
      %1641 = vmatprep.subr.mxu0 0.0
      %1642 = vmatpush1.msra.mxu0 0.0
      %1643 = vmatprep.subr.mxu0 0.0
      %1644 = vmatpush1.msra.mxu0 0.0
      %1645 = vmatprep.subr.mxu0 0.0
      %1646 = vmatpush1.msra.mxu0 0.0
      %1647 = vmatprep.subr.mxu0 0.0
      %1648 = vmatpush1.msra.mxu0 0.0
      %1649 = vmatprep.subr.mxu0 0.0
      %1650 = vmatpush1.msra.mxu0 0.0
      %1651 = vmatprep.subr.mxu0 0.0
      %1652 = vmatpush1.msra.mxu0 0.0
      %1653 = vmatprep.subr.mxu0 0.0
      %1654 = vmatpush1.msra.mxu0 0.0
      %1655 = vmatprep.subr.mxu0 0.0
      %1656 = vmatpush1.msra.mxu0 0.0
      %1657 = vmatprep.subr.mxu0 0.0
      %1658 = vmatpush1.msra.mxu0 0.0
      %1659 = vmatprep.subr.mxu0 0.0
      %1660 = vmatpush1.msra.mxu0 0.0
      %1661 = vmatprep.subr.mxu0 0.0
      %1662 = vmatpush1.msra.mxu0 0.0
      %1663 = vmatprep.subr.mxu0 0.0
      %1664 = vmatpush1.msra.mxu0 0.0
      %1665 = vmatprep.subr.mxu0 0.0
      %1666 = vmatpush1.msra.mxu0 0.0
      %1667 = vmatprep.subr.mxu0 0.0
      %1668 = vmatpush1.msra.mxu0 0.0
      %1669 = vmatprep.subr.mxu0 0.0
      %1670 = vmatpush1.msra.mxu0 0.0
      %1671 = vmatprep.subr.mxu0 0.0
      %1672 = vmatpush1.msra.mxu0 0.0
      %1673 = vmatprep.subr.mxu0 0.0
      %1674 = vmatpush1.msra.mxu0 0.0
      %1675 = vmatprep.subr.mxu0 0.0
      %1676 = vmatpush1.msra.mxu0 0.0
      %1677 = vmatprep.subr.mxu0 0.0
      %1678 = vmatpush1.msra.mxu0 0.0
      %1679 = vmatprep.subr.mxu0 0.0
      %1680 = vmatpush1.msra.mxu0 0.0
      %1681 = vmatprep.subr.mxu0 0.0
      %1682 = vmatpush1.msra.mxu0 0.0
      %1683 = vmatprep.subr.mxu0 0.0
      %1684 = vmatpush1.msra.mxu0 0.0
      %1685 = vmatprep.mubr.f32.mxu0 0.0
      %1686 = vmatmul.mubr.f32.gmra.mrb[0].mxu0 %v1385
      %v1687 = vpop.f32.mrb[0].mxu0
      %v1688 = vadd.f32 %v1376, %v1687
      %v1689 = vpop.f32.mrb[0].mxu0
      %v1690 = vadd.f32 %v1376, %v1689
      %1691 = vmatprep.mubr.f32.mxu0 0.0
      %1692 = vmatmul.mubr.f32.gmra.mrb[0].mxu0 %v1388
      %v1693 = vpop.f32.mrb[0].mxu0
      %v1694 = vadd.f32 %v1381, %v1693
      %v1695 = vpop.f32.mrb[0].mxu0
      %v1696 = vadd.f32 %v1381, %v1695
      %1697 = vdwg.mxu0
      %v1698 = vmax.f32 %v1457, 0.0
      %v1699 = vmax.f32 %v1459, 0.0
      %v1700 = vmax.f32 %v1534, 0.0
      %v1701 = vmax.f32 %v1536, 0.0
      %v1702 = vmax.f32 %v1611, 0.0
      %v1703 = vmax.f32 %v1613, 0.0
      %v1704 = vmax.f32 %v1688, 0.0
      %v1705 = vmax.f32 %v1690, 0.0
      %v1706 = vmax.f32 %v1463, 0.0
      %v1707 = vmax.f32 %v1465, 0.0
      %v1708 = vmax.f32 %v1540, 0.0
      %v1709 = vmax.f32 %v1542, 0.0
      %v1710 = vmax.f32 %v1617, 0.0
      %v1711 = vmax.f32 %v1619, 0.0
      %v1712 = vmax.f32 %v1694, 0.0
      %v1713 = vmax.f32 %v1696, 0.0
      %v1714 = vld [vmem:[%s9] sm:$0xff]
      %v1715 = vld [vmem:[%s9 + $0x8] sm:$0xff]
      %1717 = vset.pattern.permute.xlu0 0
      %1718 = vperm.xlu0 %1717, %v1714
      %v1719 = vpop.permute.xlu0 %1718
      %1722 = vset.pattern.permute.xlu0 0
      %1723 = vperm.xlu0 %1722, %v1715
      %v1724 = vpop.permute.xlu0 %1723
      %v1726 = vmul.f32 %v1719, %v1698
      %v1727 = vmul.f32 %v1719, %v1699
      %v1728 = vmul.f32 %v1719, %v1700
      %v1729 = vmul.f32 %v1719, %v1701
      %v1730 = vmul.f32 %v1719, %v1702
      %v1731 = vmul.f32 %v1719, %v1703
      %v1732 = vmul.f32 %v1719, %v1704
      %v1733 = vmul.f32 %v1719, %v1705
      %v1734 = vmul.f32 %v1724, %v1706
      %v1735 = vmul.f32 %v1724, %v1707
      %v1736 = vmul.f32 %v1724, %v1708
      %v1737 = vmul.f32 %v1724, %v1709
      %v1738 = vmul.f32 %v1724, %v1710
      %v1739 = vmul.f32 %v1724, %v1711
      %v1740 = vmul.f32 %v1724, %v1712
      %v1741 = vmul.f32 %v1724, %v1713
      %v1742 = vadd.f32 %v1726, %v1734
      %v1743 = vrot.slane %v1742, 4
      %v1744 = vadd.f32 %v1742, %v1743
      %v1745 = vrot.slane %v1744, 2
      %v1746 = vadd.f32 %v1744, %v1745
      %v1747 = vrot.slane %v1746, 1
      %v1748 = vadd.f32 %v1746, %v1747
      %v1749 = vadd.f32 %v1727, %v1735
      %v1750 = vrot.slane %v1749, 4
      %v1751 = vadd.f32 %v1749, %v1750
      %v1752 = vrot.slane %v1751, 2
      %v1753 = vadd.f32 %v1751, %v1752
      %v1754 = vrot.slane %v1753, 1
      %v1755 = vadd.f32 %v1753, %v1754
      %v1756 = vadd.f32 %v1728, %v1736
      %v1757 = vrot.slane %v1756, 4
      %v1758 = vadd.f32 %v1756, %v1757
      %v1759 = vrot.slane %v1758, 2
      %v1760 = vadd.f32 %v1758, %v1759
      %v1761 = vrot.slane %v1760, 1
      %v1762 = vadd.f32 %v1760, %v1761
      %v1763 = vadd.f32 %v1729, %v1737
      %v1764 = vrot.slane %v1763, 4
      %v1765 = vadd.f32 %v1763, %v1764
      %v1766 = vrot.slane %v1765, 2
      %v1767 = vadd.f32 %v1765, %v1766
      %v1768 = vrot.slane %v1767, 1
      %v1769 = vadd.f32 %v1767, %v1768
      %v1770 = vadd.f32 %v1730, %v1738
      %v1771 = vrot.slane %v1770, 4
      %v1772 = vadd.f32 %v1770, %v1771
      %v1773 = vrot.slane %v1772, 2
      %v1774 = vadd.f32 %v1772, %v1773
      %v1775 = vrot.slane %v1774, 1
      %v1776 = vadd.f32 %v1774, %v1775
      %v1777 = vadd.f32 %v1731, %v1739
      %v1778 = vrot.slane %v1777, 4
      %v1779 = vadd.f32 %v1777, %v1778
      %v1780 = vrot.slane %v1779, 2
      %v1781 = vadd.f32 %v1779, %v1780
      %v1782 = vrot.slane %v1781, 1
      %v1783 = vadd.f32 %v1781, %v1782
      %v1784 = vadd.f32 %v1732, %v1740
      %v1785 = vrot.slane %v1784, 4
      %v1786 = vadd.f32 %v1784, %v1785
      %v1787 = vrot.slane %v1786, 2
      %v1788 = vadd.f32 %v1786, %v1787
      %v1789 = vrot.slane %v1788, 1
      %v1790 = vadd.f32 %v1788, %v1789
      %v1791 = vadd.f32 %v1733, %v1741
      %v1792 = vrot.slane %v1791, 4
      %v1793 = vadd.f32 %v1791, %v1792
      %v1794 = vrot.slane %v1793, 2
      %v1795 = vadd.f32 %v1793, %v1794
      %v1796 = vrot.slane %v1795, 1
      %v1797 = vadd.f32 %v1795, %v1796
      %v1798 = vld [vmem:[#allocation2] sm:$0x1]
      %1800 = vset.pattern.permute.xlu0 0
      %1801 = vperm.xlu0 %1800, %v1798
      %v1802 = vpop.permute.xlu0 %1801
      %v1804 = vlaneseq
      %v1805 = vshrl.u32 %v1804, 7
      %v1806 = vsub.s32 0, %v1805
      %v1807 = vrot.slane %v1802, %v1806
      %v1808 = vadd.f32 %v1748, %v1807
      %v1809 = vadd.f32 %v1755, %v1807
      %v1810 = vadd.f32 %v1762, %v1807
      %v1811 = vadd.f32 %v1769, %v1807
      %v1812 = vadd.f32 %v1776, %v1807
      %v1813 = vadd.f32 %v1783, %v1807
      %v1814 = vadd.f32 %v1790, %v1807
      %v1815 = vadd.f32 %v1797, %v1807
      %v1816 = vtanh.pop %v1808
      %v1817 = vtanh.pop %v1809
      %v1818 = vtanh.pop %v1810
      %v1819 = vtanh.pop %v1811
      %v1820 = vtanh.pop %v1812
      %v1821 = vtanh.pop %v1813
      %v1822 = vtanh.pop %v1814
      %v1823 = vtanh.pop %v1815
      %v1832 = vcombine.low %v1816, %v1817
      %v1833 = vcombine.low %v1818, %v1819
      %v1834 = vcombine.low %v1820, %v1821
      %v1835 = vcombine.low %v1822, %v1823
      %v1837 = vunpack.c.l.s4 1966171168
      %v1838 = vunpack.c.0.s8 %v1837
      %v1839 = vlaneseq
      %v1840 = vshrl.u32 %v1839, 7
      %v1841 = vsub.s32 %v1838, %v1840
      %v1842 = vrot.slane %v1832, %v1841
      %v1844 = vunpack.c.l.s4 1966171168
      %v1845 = vunpack.c.0.s8 %v1844
      %v1846 = vlaneseq
      %v1847 = vshrl.u32 %v1846, 7
      %v1848 = vsub.s32 %v1845, %v1847
      %v1849 = vrot.slane %v1833, %v1848
      %v1851 = vunpack.c.l.s4 1966171168
      %v1852 = vunpack.c.0.s8 %v1851
      %v1853 = vlaneseq
      %v1854 = vshrl.u32 %v1853, 7
      %v1855 = vsub.s32 %v1852, %v1854
      %v1856 = vrot.slane %v1834, %v1855
      %v1858 = vunpack.c.l.s4 1966171168
      %v1859 = vunpack.c.0.s8 %v1858
      %v1860 = vlaneseq
      %v1861 = vshrl.u32 %v1860, 7
      %v1862 = vsub.s32 %v1859, %v1861
      %v1863 = vrot.slane %v1835, %v1862
      %v1864 = vcombine.low %v1842, %v1849
      %v1865 = vcombine.low %v1856, %v1863
      %v1867 = vunpack.c.l.s4 1966171168
      %v1868 = vunpack.c.0.s8 %v1867
      %v1869 = vlaneseq
      %v1870 = vshrl.u32 %v1869, 7
      %v1871 = vsub.s32 %v1868, %v1870
      %v1872 = vrot.slane %v1864, %v1871
      %v1874 = vunpack.c.l.s4 1966171168
      %v1875 = vunpack.c.0.s8 %v1874
      %v1876 = vlaneseq
      %v1877 = vshrl.u32 %v1876, 7
      %v1878 = vsub.s32 %v1875, %v1877
      %v1879 = vrot.slane %v1865, %v1878
      %v1880 = vcombine.low %v1872, %v1879
      %1882 = vst [vmem:[%s426] sm:$0xff] %v1880
      %s1883 = smul.u32 8, %s24
      %p1884 = scmp.lt.s32.totalorder %s1883, 15
      %s1885 = scalar_select %p1884, %s1883, 15
      %s1886 = scalar_lea.vmem %s11, %s1885
      // Predicated region
      $region65: #{pointwise_scorer.1} parent=63 // pred_check
        %p1887 = pneg %p288
      $region66: #{pointwise_scorer.1} parent=63 // pred_check_branch
        %1889 = sbr.rel (%p1887) target = $region68
      $region67: #{pointwise_scorer.1} parent=63 // pred_region
        %s1890 = smul.u32 8, %s24
      $region68: #{pointwise_scorer.1} parent=63 // pred_fallthru
        _
    $region64: #{pointwise_scorer.1} parent=5 // pred_fallthru
      _
    %p1891 = scmp.le.s32.totalorder 2, %s19
    // Predicated region
    $region69: #{pointwise_scorer.1} parent=5 // pred_check
      %p1892 = pneg %p1891
    $region70: #{pointwise_scorer.1} parent=5 // pred_check_branch
      %1894 = sbr.rel (%p1892) target = $region72
    $region71: #{pointwise_scorer.1} parent=5 // pred_region
      %s1895 = ssub.s32 %s19, 2
      // Predicated region
      $region73: #{pointwise_scorer.1} parent=71 // pred_check
        %p1896 = pneg %p294
      $region74: #{pointwise_scorer.1} parent=71 // pred_check_branch
        %1898 = sbr.rel (%p1896) target = $region76
      $region75: #{pointwise_scorer.1} parent=71 // pred_region
        %s1899 = smul.u32 8, %s25
        %p1900 = scmp.lt.s32.totalorder %s1899, 15
        %s1901 = scalar_select %p1900, %s1899, 15
        %s1902 = scalar_lea.vmem %s11, %s1901
      $region76: #{pointwise_scorer.1} parent=71 // pred_fallthru
        _
    $region72: #{pointwise_scorer.1} parent=5 // pred_fallthru
      _
  $region6: #{pointwise_scorer.1} parent=0 // loop_footer
    %s23 = sadd.s32 1, %s19
  $region7: #{pointwise_scorer.1} parent=0 // loop_footer_branch
    %18 = sbr.rel target = $region3
  $region8: #{pointwise_scorer.1} parent=0 // loop_exit
    _

</llo_original>
